<compile_context>
chip_gen: v7x
topology: tpu7x:2x2x1
jax: 0.10.0
libtpu: 0.0.40
codegen_flags: <defaults>
</compile_context>

<pallas_src>
import math

import jax
import jax.numpy as jnp
from jax import lax
from jax.experimental import pallas as pl
from jax.experimental.pallas import tpu as pltpu

KH = KW = 4
STRIDE = 2
PADDING = 1          # fixed by the module (kernel_size=4, stride=2, padding=1)


# --------------------------------------------------------------------------- #
# Per-generation VMEM budgeting
# --------------------------------------------------------------------------- #
def _vmem_limits():
    """(tile budget, vmem_limit_bytes) derived from the actual chip's VMEM."""
    try:
        cap = int(pltpu.get_tpu_info().vmem_capacity_bytes)
    except Exception:
        cap = 64 * 1024 * 1024                       # v7x physical; safe everywhere
    vmem_limit = min(cap * 3 // 4, 100 * 1024 * 1024)
    tile_budget = vmem_limit * 3 // 4                # headroom for Mosaic scratch
    return tile_budget, vmem_limit


def _choose_tiles(N, H, W, cin, F, budget):
    """Pick rows-per-band R (output tile TM = R*W) and output-column tile TN.

    The per-step working set (double-buffered bf16 band, double-buffered bf16
    weight tile, f32 out tile x2 + f32 accumulator) must fit `budget`; huge
    Cin*Cout layers get an F grid axis instead of blowing VMEM; and we keep
    >= 4 grid steps so both v7x TensorCores get >= 2 pipelined iterations.
    """
    r_unit = 8 // math.gcd(W, 8)                     # keeps TM = R*W a multiple of 8

    def working_set(R, TN):
        TM, L = R * W, (R + 2) * W + 2
        return (2 * L * cin * 2                      # input band (bf16, x2 buffers)
                + 2 * 9 * cin * TN * 2               # weight tile (bf16, x2 buffers)
                + 3 * TM * TN * 4                    # f32 out tile x2 + accumulator
                + 2 * TN * 4)                        # bias

    # 1) tile the output columns while the resident weight tile is huge
    TN = F
    while TN % 256 == 0 and TN > 256 and 2 * 9 * cin * TN * 2 > budget // 4:
        TN //= 2
    # 2) largest row band that fits the budget
    R = pl.cdiv(H, r_unit) * r_unit
    while R > r_unit and working_set(R, TN) > budget:
        R = max(r_unit, (R // 2 // r_unit) * r_unit)
    while TN % 256 == 0 and TN > 128 and working_set(R, TN) > budget:
        TN //= 2
    # 3) prefer >= 4 parallel grid steps when there is enough work
    while R > r_unit and N * pl.cdiv(H, R) * (F // TN) < 4:
        R = max(r_unit, (R // 2 // r_unit) * r_unit)
    return R, TN


# --------------------------------------------------------------------------- #
# Weight / bias packing (plain XLA, tiny)
# --------------------------------------------------------------------------- #
def _pack_weights(weight, bias, cout_pad, mm_dtype):
    """Pack ConvTranspose2d weights (Cin,Cout,4,4) into per-tap matrices
    (9, Cin, 4*Cout_pad).  Output pixel (2m+ry, 2p+rx) only receives kernel tap
    k from neighbourhood offset d where (r=0,d=0)->k=3, (0,1)->1, (1,1)->2,
    (1,2)->0; other (r,d) pairs contribute nothing and stay zero."""
    cin, cout = weight.shape[0], weight.shape[1]
    kmap = {(0, 0): 3, (0, 1): 1, (1, 1): 2, (1, 2): 0}
    w = jnp.zeros((3, 3, cin, 2, 2, cout_pad), weight.dtype)
    for (ry, dy), kh in kmap.items():
        for (rx, dx), kw in kmap.items():
            w = w.at[dy, dx, :, ry, rx, :cout].set(weight[:, :, kh, kw])
    w_taps = w.reshape(9, cin, 4 * cout_pad).astype(mm_dtype)
    b_row = (jnp.zeros((2, 2, cout_pad), jnp.float32)
             .at[:, :, :cout].set(bias.astype(jnp.float32))
             .reshape(1, 4 * cout_pad))
    return w_taps, b_row


# --------------------------------------------------------------------------- #
# Pallas kernel: fused 9-tap deconv matmul + bias + ReLU
# --------------------------------------------------------------------------- #
def _make_kernel(W):
    """x_ref: (1, (R+2)*W+2, Cin) bf16 flattened input band (1-image-row halo)
       w_ref: (9, Cin, TN) bf16 per-tap packed weights
       b_ref: (1, TN) f32 packed bias
       o_ref: (R*W, TN) f32; row m_l*W+p = 2x2 output block of pixel (m_l, p)."""
    def kernel(x_ref, w_ref, b_ref, o_ref):
        TM = o_ref.shape[0]
        cin = x_ref.shape[2]
        # column-within-image of every tile row (tile rows are (m_l, p) row-major)
        p = lax.broadcasted_iota(jnp.int32, (TM, cin), 0) % W
        not_left = p != 0
        not_right = p != (W - 1)

        acc = jnp.zeros(o_ref.shape, jnp.float32)
        for dy in range(3):                          # unrolled: 9 taps, K = Cin each
            for dx in range(3):
                xs = x_ref[0, pl.ds(dy * W + dx, TM), :]
                # dx=0 / dx=2 taps wrap across image rows in the flattened
                # layout exactly where the zero W-padding should be -> mask.
                if dx == 0:
                    xs = jnp.where(not_left, xs, jnp.zeros_like(xs))
                elif dx == 2:
                    xs = jnp.where(not_right, xs, jnp.zeros_like(xs))
                acc = acc + jnp.dot(xs, w_ref[dy * 3 + dx],
                                    preferred_element_type=jnp.float32)
        o_ref[...] = jnp.maximum(acc + b_ref[...], 0.0).astype(o_ref.dtype)

    return kernel


# --------------------------------------------------------------------------- #
# Public forward
# --------------------------------------------------------------------------- #
@jax.jit
def cnn_transposed_layer_forward(x_nchw, weight, bias):
    """ConvTranspose2d(Cin, Cout, 4, stride=2, padding=1) + ReLU.

    x_nchw : (N, Cin, H, W)        float32
    weight : (Cin, Cout, 4, 4)     float32 (PyTorch ConvTranspose2d layout)
    bias   : (Cout,)               float32
    returns: (N, Cout, 2H, 2W)     float32
    """
    N, Cin, H, W = x_nchw.shape
    Cout = weight.shape[1]

    # Lane-dense, MXU-friendly output columns: F = 4*Cout_pad, multiple of 256.
    Cout_pad = ((Cout + 63) // 64) * 64
    F = 4 * Cout_pad

    tile_budget, vmem_limit = _vmem_limits()
    R, TN = _choose_tiles(N, H, W, Cin, F, tile_budget)
    nF = F // TN
    NB = pl.cdiv(H, R)
    H_pad = NB * R
    TM = R * W
    L = (R + 2) * W + 2

    # NHWC bf16; zero-pad H by 1 (halo) and up to H_pad; flatten (h, w) so a
    # (dy, dx) tap shift becomes a shift of dy*W+dx flattened rows; +-1 flat
    # row of padding covers the extreme corner reads (masked in-kernel anyway).
    x = jnp.transpose(x_nchw, (0, 2, 3, 1)).astype(jnp.bfloat16)
    x = jnp.pad(x, ((0, 0), (1, H_pad - H + 1), (0, 0), (0, 0)))
    x_flat = jnp.pad(x.reshape(N, (H_pad + 2) * W, Cin), ((0, 0), (1, 1), (0, 0)))

    # Overlapping row bands (1-image-row halo each side): ~2/R duplication, so
    # the kernel streams ~1x the input instead of the old 9x patch tensor.
    x_bands = jnp.stack(
        [x_flat[:, b * R * W: b * R * W + L, :] for b in range(NB)], axis=1
    ).reshape(N * NB, L, Cin)

    w_taps, b_row = _pack_weights(weight, bias, Cout_pad, jnp.bfloat16)

    M_total = N * NB * TM
    cost = pl.CostEstimate(
        flops=2 * M_total * 9 * Cin * F,
        transcendentals=0,
        bytes_accessed=(2 * N * NB * L * Cin + 2 * 9 * Cin * F + 4 * F
                        + 4 * M_total * F))

    out2d = pl.pallas_call(
        _make_kernel(W),
        out_shape=jax.ShapeDtypeStruct((M_total, F), jnp.float32),
        grid_spec=pltpu.PrefetchScalarGridSpec(
            num_scalar_prefetch=0,
            # F-tile axis outermost so the weight tile is DMA'd only nF times
            # (the band input is grid-invariant along j -> fetched once per i).
            grid=(nF, N * NB),
            in_specs=[
                pl.BlockSpec((1, L, Cin), lambda j, i: (i, 0, 0)),
                pl.BlockSpec((9, Cin, TN), lambda j, i: (0, 0, j)),
                pl.BlockSpec((1, TN), lambda j, i: (0, j)),
            ],
            out_specs=pl.BlockSpec((TM, TN), lambda j, i: (i, j)),
        ),
        compiler_params=pltpu.CompilerParams(
            dimension_semantics=("parallel", "parallel"),
            vmem_limit_bytes=vmem_limit),
        cost_estimate=cost,
    )(x_bands, w_taps, b_row)

    # Single fused XLA transpose: (n, m, p, ry, rx, co) -> NCHW interleave.
    # TODO(synk): for NHWC consumers this pass disappears entirely (swap the
    # (W, ry) axes in-kernel and return (N, 2H, 2W, Cout) directly).
    out = out2d.reshape(N, H_pad, W, 2, 2, Cout_pad)[:, :H]
    out = jnp.transpose(out, (0, 5, 1, 3, 2, 4)).reshape(N, Cout_pad, 2 * H, 2 * W)
    return out[:, :Cout]


# --------------------------------------------------------------------------- #
# Self-test
# --------------------------------------------------------------------------- #
if __name__ == "__main__":
    key = jax.random.PRNGKey(0)
    k_x, k_w, k_b = jax.random.split(key, 3)

    N, Cin, Cout, H, W = 2, 4, 8, 16, 16
    x = jax.random.normal(k_x, (N, Cin, H, W), dtype=jnp.float32)
    fan = Cout * KH * KW
    bound = 1.0 / (fan ** 0.5)
    weight = jax.random.uniform(k_w, (Cin, Cout, KH, KW), jnp.float32,
                                minval=-bound, maxval=bound)
    bias = jax.random.uniform(k_b, (Cout,), jnp.float32,
                              minval=-bound, maxval=bound)

    out = cnn_transposed_layer_forward(x, weight, bias)
    out = jax.block_until_ready(out)

    # Reference: ConvTranspose2d(k=4, s=2, p=1) == conv over the stride-dilated
    # input with padding (k-1-p)=2 and a spatially flipped HWIO kernel.
    x_nhwc = jnp.transpose(x, (0, 2, 3, 1))
    k_hwio = jnp.transpose(weight, (2, 3, 0, 1))[::-1, ::-1, :, :]
    ref = lax.conv_general_dilated(
        x_nhwc, k_hwio,
        window_strides=(1, 1),
        padding=[(KH - 1 - PADDING, KH - 1 - PADDING),
                 (KW - 1 - PADDING, KW - 1 - PADDING)],
        lhs_dilation=(STRIDE, STRIDE),
        dimension_numbers=("NHWC", "HWIO", "NHWC"),
        precision=lax.Precision.HIGHEST)
    ref = jnp.maximum(ref + bias, 0.0)
    ref = jnp.transpose(ref, (0, 3, 1, 2))

    assert out.shape == (N, Cout, 2 * H, 2 * W), out.shape
    # bf16 MXU operands -> slightly looser tolerance vs. the f32 reference.
    assert jnp.allclose(out, ref, atol=2e-2, rtol=2e-2), (
        float(jnp.max(jnp.abs(out - ref))))
    print("KERNEL_OK")
</pallas_src>

<mosaic_0001>
module attributes {stable_mosaic.version = 11 : i64} {
  func.func @kernel(%arg0: i32, %arg1: i32, %arg2: memref<1x162x4xbf16, #tpu.memory_space<vmem>>, %arg3: memref<9x4x256xbf16, #tpu.memory_space<vmem>>, %arg4: memref<1x256xf32, #tpu.memory_space<vmem>>, %arg5: memref<128x256xf32, #tpu.memory_space<vmem>>) attributes {dimension_semantics = [#tpu.dimension_semantics<parallel>, #tpu.dimension_semantics<parallel>], iteration_bounds = array<i64: 1, 4>, scalar_prefetch = 0 : i64, scratch_operands = 0 : i64, tpu.core_type = #tpu.core_type<tc>, window_params = [{transform_indices = @transform_0, window_bounds = array<i64: 1, 162, 4>}, {transform_indices = @transform_1, window_bounds = array<i64: 9, 4, 256>}, {transform_indices = @transform_2, window_bounds = array<i64: 1, 256>}, {transform_indices = @transform_3, window_bounds = array<i64: 128, 256>}]} {
    %0 = tpu.iota {dimensions = array<i32: 0>} : vector<128x4xi32>
    %c16_i32 = arith.constant 16 : i32
    %c0_i32 = arith.constant 0 : i32
    %1 = arith.cmpi eq, %c16_i32, %c0_i32 : i32
    %c1_i32 = arith.constant 1 : i32
    %2 = arith.select %1, %c1_i32, %c16_i32 : i32
    %3 = vector.broadcast %2 : i32 to vector<128x4xi32>
    %4 = arith.remsi %0, %3 : vector<128x4xi32>
    %c0_i32_0 = arith.constant 0 : i32
    %5 = vector.broadcast %c0_i32_0 : i32 to vector<128x4xi32>
    %6 = arith.cmpi ne, %4, %5 : vector<128x4xi32>
    %c0_i32_1 = arith.constant 0 : i32
    %7 = vector.broadcast %c0_i32_1 : i32 to vector<128x4xi32>
    %8 = arith.cmpi slt, %4, %7 : vector<128x4xi32>
    %c0_i32_2 = arith.constant 0 : i32
    %9 = arith.cmpi slt, %2, %c0_i32_2 : i32
    %10 = vector.broadcast %9 : i1 to vector<128x4xi1>
    %11 = vector.broadcast %10 : vector<128x4xi1> to vector<128x4xi1>
    %12 = arith.xori %8, %11 : vector<128x4xi1>
    %13 = arith.andi %12, %6 : vector<128x4xi1>
    %14 = vector.broadcast %2 : i32 to vector<128x4xi32>
    %15 = arith.addi %4, %14 : vector<128x4xi32>
    %16 = arith.select %13, %15, %4 : vector<128x4xi1>, vector<128x4xi32>
    %c0_i32_3 = arith.constant 0 : i32
    %17 = vector.broadcast %c0_i32_3 : i32 to vector<128x4xi32>
    %18 = arith.cmpi ne, %16, %17 : vector<128x4xi32>
    %c15_i32 = arith.constant 15 : i32
    %19 = vector.broadcast %c15_i32 : i32 to vector<128x4xi32>
    %20 = arith.cmpi ne, %16, %19 : vector<128x4xi32>
    %cst = arith.constant 0.000000e+00 : f32
    %21 = vector.broadcast %cst : f32 to vector<128x256xf32>
    %c0 = arith.constant 0 : index
    %c0_4 = arith.constant 0 : index
    %c0_5 = arith.constant 0 : index
    %22 = vector.load %arg2[%c0, %c0_4, %c0_5] : memref<1x162x4xbf16, #tpu.memory_space<vmem>>, vector<1x128x4xbf16>
    %23 = vector.shape_cast %22 : vector<1x128x4xbf16> to vector<128x4xbf16>
    %cst_6 = arith.constant 0.000000e+00 : bf16
    %24 = vector.broadcast %cst_6 : bf16 to vector<128x4xbf16>
    %25 = arith.select %18, %23, %24 : vector<128x4xi1>, vector<128x4xbf16>
    %c0_7 = arith.constant 0 : index
    %c0_8 = arith.constant 0 : index
    %c0_9 = arith.constant 0 : index
    %26 = vector.load %arg3[%c0_7, %c0_8, %c0_9] : memref<9x4x256xbf16, #tpu.memory_space<vmem>>, vector<1x4x256xbf16>
    %27 = vector.shape_cast %26 : vector<1x4x256xbf16> to vector<4x256xbf16>
    %cst_10 = arith.constant dense<0.000000e+00> : vector<128x256xf32>
    %28 = tpu.matmul %25, %27, %cst_10 {dimension_numbers = #tpu.dot_dimension_numbers<[1], [0], [0], [1], [0, 0, 1, 1], [], []>} : vector<128x4xbf16>, vector<4x256xbf16>, vector<128x256xf32> -> vector<128x256xf32>
    %29 = arith.addf %21, %28 : vector<128x256xf32>
    %c0_11 = arith.constant 0 : index
    %c1 = arith.constant 1 : index
    %c0_12 = arith.constant 0 : index
    %30 = vector.load %arg2[%c0_11, %c1, %c0_12] : memref<1x162x4xbf16, #tpu.memory_space<vmem>>, vector<1x128x4xbf16>
    %31 = vector.shape_cast %30 : vector<1x128x4xbf16> to vector<128x4xbf16>
    %c1_13 = arith.constant 1 : index
    %c0_14 = arith.constant 0 : index
    %c0_15 = arith.constant 0 : index
    %32 = vector.load %arg3[%c1_13, %c0_14, %c0_15] : memref<9x4x256xbf16, #tpu.memory_space<vmem>>, vector<1x4x256xbf16>
    %33 = vector.shape_cast %32 : vector<1x4x256xbf16> to vector<4x256xbf16>
    %cst_16 = arith.constant dense<0.000000e+00> : vector<128x256xf32>
    %34 = tpu.matmul %31, %33, %cst_16 {dimension_numbers = #tpu.dot_dimension_numbers<[1], [0], [0], [1], [0, 0, 1, 1], [], []>} : vector<128x4xbf16>, vector<4x256xbf16>, vector<128x256xf32> -> vector<128x256xf32>
    %35 = arith.addf %29, %34 : vector<128x256xf32>
    %c0_17 = arith.constant 0 : index
    %c2 = arith.constant 2 : index
    %c0_18 = arith.constant 0 : index
    %36 = vector.load %arg2[%c0_17, %c2, %c0_18] : memref<1x162x4xbf16, #tpu.memory_space<vmem>>, vector<1x128x4xbf16>
    %37 = vector.shape_cast %36 : vector<1x128x4xbf16> to vector<128x4xbf16>
    %cst_19 = arith.constant 0.000000e+00 : bf16
    %38 = vector.broadcast %cst_19 : bf16 to vector<128x4xbf16>
    %39 = arith.select %20, %37, %38 : vector<128x4xi1>, vector<128x4xbf16>
    %c2_20 = arith.constant 2 : index
    %c0_21 = arith.constant 0 : index
    %c0_22 = arith.constant 0 : index
    %40 = vector.load %arg3[%c2_20, %c0_21, %c0_22] : memref<9x4x256xbf16, #tpu.memory_space<vmem>>, vector<1x4x256xbf16>
    %41 = vector.shape_cast %40 : vector<1x4x256xbf16> to vector<4x256xbf16>
    %cst_23 = arith.constant dense<0.000000e+00> : vector<128x256xf32>
    %42 = tpu.matmul %39, %41, %cst_23 {dimension_numbers = #tpu.dot_dimension_numbers<[1], [0], [0], [1], [0, 0, 1, 1], [], []>} : vector<128x4xbf16>, vector<4x256xbf16>, vector<128x256xf32> -> vector<128x256xf32>
    %43 = arith.addf %35, %42 : vector<128x256xf32>
    %c0_24 = arith.constant 0 : index
    %c16 = arith.constant 16 : index
    %c0_25 = arith.constant 0 : index
    %44 = vector.load %arg2[%c0_24, %c16, %c0_25] : memref<1x162x4xbf16, #tpu.memory_space<vmem>>, vector<1x128x4xbf16>
    %45 = vector.shape_cast %44 : vector<1x128x4xbf16> to vector<128x4xbf16>
    %cst_26 = arith.constant 0.000000e+00 : bf16
    %46 = vector.broadcast %cst_26 : bf16 to vector<128x4xbf16>
    %47 = arith.select %18, %45, %46 : vector<128x4xi1>, vector<128x4xbf16>
    %c3 = arith.constant 3 : index
    %c0_27 = arith.constant 0 : index
    %c0_28 = arith.constant 0 : index
    %48 = vector.load %arg3[%c3, %c0_27, %c0_28] : memref<9x4x256xbf16, #tpu.memory_space<vmem>>, vector<1x4x256xbf16>
    %49 = vector.shape_cast %48 : vector<1x4x256xbf16> to vector<4x256xbf16>
    %cst_29 = arith.constant dense<0.000000e+00> : vector<128x256xf32>
    %50 = tpu.matmul %47, %49, %cst_29 {dimension_numbers = #tpu.dot_dimension_numbers<[1], [0], [0], [1], [0, 0, 1, 1], [], []>} : vector<128x4xbf16>, vector<4x256xbf16>, vector<128x256xf32> -> vector<128x256xf32>
    %51 = arith.addf %43, %50 : vector<128x256xf32>
    %c0_30 = arith.constant 0 : index
    %c17 = arith.constant 17 : index
    %c0_31 = arith.constant 0 : index
    %52 = vector.load %arg2[%c0_30, %c17, %c0_31] : memref<1x162x4xbf16, #tpu.memory_space<vmem>>, vector<1x128x4xbf16>
    %53 = vector.shape_cast %52 : vector<1x128x4xbf16> to vector<128x4xbf16>
    %c4 = arith.constant 4 : index
    %c0_32 = arith.constant 0 : index
    %c0_33 = arith.constant 0 : index
    %54 = vector.load %arg3[%c4, %c0_32, %c0_33] : memref<9x4x256xbf16, #tpu.memory_space<vmem>>, vector<1x4x256xbf16>
    %55 = vector.shape_cast %54 : vector<1x4x256xbf16> to vector<4x256xbf16>
    %cst_34 = arith.constant dense<0.000000e+00> : vector<128x256xf32>
    %56 = tpu.matmul %53, %55, %cst_34 {dimension_numbers = #tpu.dot_dimension_numbers<[1], [0], [0], [1], [0, 0, 1, 1], [], []>} : vector<128x4xbf16>, vector<4x256xbf16>, vector<128x256xf32> -> vector<128x256xf32>
    %57 = arith.addf %51, %56 : vector<128x256xf32>
    %c0_35 = arith.constant 0 : index
    %c18 = arith.constant 18 : index
    %c0_36 = arith.constant 0 : index
    %58 = vector.load %arg2[%c0_35, %c18, %c0_36] : memref<1x162x4xbf16, #tpu.memory_space<vmem>>, vector<1x128x4xbf16>
    %59 = vector.shape_cast %58 : vector<1x128x4xbf16> to vector<128x4xbf16>
    %cst_37 = arith.constant 0.000000e+00 : bf16
    %60 = vector.broadcast %cst_37 : bf16 to vector<128x4xbf16>
    %61 = arith.select %20, %59, %60 : vector<128x4xi1>, vector<128x4xbf16>
    %c5 = arith.constant 5 : index
    %c0_38 = arith.constant 0 : index
    %c0_39 = arith.constant 0 : index
    %62 = vector.load %arg3[%c5, %c0_38, %c0_39] : memref<9x4x256xbf16, #tpu.memory_space<vmem>>, vector<1x4x256xbf16>
    %63 = vector.shape_cast %62 : vector<1x4x256xbf16> to vector<4x256xbf16>
    %cst_40 = arith.constant dense<0.000000e+00> : vector<128x256xf32>
    %64 = tpu.matmul %61, %63, %cst_40 {dimension_numbers = #tpu.dot_dimension_numbers<[1], [0], [0], [1], [0, 0, 1, 1], [], []>} : vector<128x4xbf16>, vector<4x256xbf16>, vector<128x256xf32> -> vector<128x256xf32>
    %65 = arith.addf %57, %64 : vector<128x256xf32>
    %c0_41 = arith.constant 0 : index
    %c32 = arith.constant 32 : index
    %c0_42 = arith.constant 0 : index
    %66 = vector.load %arg2[%c0_41, %c32, %c0_42] : memref<1x162x4xbf16, #tpu.memory_space<vmem>>, vector<1x128x4xbf16>
    %67 = vector.shape_cast %66 : vector<1x128x4xbf16> to vector<128x4xbf16>
    %cst_43 = arith.constant 0.000000e+00 : bf16
    %68 = vector.broadcast %cst_43 : bf16 to vector<128x4xbf16>
    %69 = arith.select %18, %67, %68 : vector<128x4xi1>, vector<128x4xbf16>
    %c6 = arith.constant 6 : index
    %c0_44 = arith.constant 0 : index
    %c0_45 = arith.constant 0 : index
    %70 = vector.load %arg3[%c6, %c0_44, %c0_45] : memref<9x4x256xbf16, #tpu.memory_space<vmem>>, vector<1x4x256xbf16>
    %71 = vector.shape_cast %70 : vector<1x4x256xbf16> to vector<4x256xbf16>
    %cst_46 = arith.constant dense<0.000000e+00> : vector<128x256xf32>
    %72 = tpu.matmul %69, %71, %cst_46 {dimension_numbers = #tpu.dot_dimension_numbers<[1], [0], [0], [1], [0, 0, 1, 1], [], []>} : vector<128x4xbf16>, vector<4x256xbf16>, vector<128x256xf32> -> vector<128x256xf32>
    %73 = arith.addf %65, %72 : vector<128x256xf32>
    %c0_47 = arith.constant 0 : index
    %c33 = arith.constant 33 : index
    %c0_48 = arith.constant 0 : index
    %74 = vector.load %arg2[%c0_47, %c33, %c0_48] : memref<1x162x4xbf16, #tpu.memory_space<vmem>>, vector<1x128x4xbf16>
    %75 = vector.shape_cast %74 : vector<1x128x4xbf16> to vector<128x4xbf16>
    %c7 = arith.constant 7 : index
    %c0_49 = arith.constant 0 : index
    %c0_50 = arith.constant 0 : index
    %76 = vector.load %arg3[%c7, %c0_49, %c0_50] : memref<9x4x256xbf16, #tpu.memory_space<vmem>>, vector<1x4x256xbf16>
    %77 = vector.shape_cast %76 : vector<1x4x256xbf16> to vector<4x256xbf16>
    %cst_51 = arith.constant dense<0.000000e+00> : vector<128x256xf32>
    %78 = tpu.matmul %75, %77, %cst_51 {dimension_numbers = #tpu.dot_dimension_numbers<[1], [0], [0], [1], [0, 0, 1, 1], [], []>} : vector<128x4xbf16>, vector<4x256xbf16>, vector<128x256xf32> -> vector<128x256xf32>
    %79 = arith.addf %73, %78 : vector<128x256xf32>
    %c0_52 = arith.constant 0 : index
    %c34 = arith.constant 34 : index
    %c0_53 = arith.constant 0 : index
    %80 = vector.load %arg2[%c0_52, %c34, %c0_53] : memref<1x162x4xbf16, #tpu.memory_space<vmem>>, vector<1x128x4xbf16>
    %81 = vector.shape_cast %80 : vector<1x128x4xbf16> to vector<128x4xbf16>
    %cst_54 = arith.constant 0.000000e+00 : bf16
    %82 = vector.broadcast %cst_54 : bf16 to vector<128x4xbf16>
    %83 = arith.select %20, %81, %82 : vector<128x4xi1>, vector<128x4xbf16>
    %c8 = arith.constant 8 : index
    %c0_55 = arith.constant 0 : index
    %c0_56 = arith.constant 0 : index
    %84 = vector.load %arg3[%c8, %c0_55, %c0_56] : memref<9x4x256xbf16, #tpu.memory_space<vmem>>, vector<1x4x256xbf16>
    %85 = vector.shape_cast %84 : vector<1x4x256xbf16> to vector<4x256xbf16>
    %cst_57 = arith.constant dense<0.000000e+00> : vector<128x256xf32>
    %86 = tpu.matmul %83, %85, %cst_57 {dimension_numbers = #tpu.dot_dimension_numbers<[1], [0], [0], [1], [0, 0, 1, 1], [], []>} : vector<128x4xbf16>, vector<4x256xbf16>, vector<128x256xf32> -> vector<128x256xf32>
    %87 = arith.addf %79, %86 : vector<128x256xf32>
    %c0_58 = arith.constant 0 : index
    %c0_59 = arith.constant 0 : index
    %88 = vector.load %arg4[%c0_58, %c0_59] : memref<1x256xf32, #tpu.memory_space<vmem>>, vector<1x256xf32>
    %89 = vector.broadcast %88 : vector<1x256xf32> to vector<128x256xf32>
    %90 = arith.addf %87, %89 : vector<128x256xf32>
    %cst_60 = arith.constant 0.000000e+00 : f32
    %91 = vector.broadcast %cst_60 : f32 to vector<128x256xf32>
    %92 = arith.maximumf %90, %91 : vector<128x256xf32>
    %c0_61 = arith.constant 0 : index
    %c0_62 = arith.constant 0 : index
    %93 = vector.load %arg5[%c0_61, %c0_62] : memref<128x256xf32, #tpu.memory_space<vmem>>, vector<128x256xf32>
    tpu.vector_store %arg5[%c0_61, %c0_62], %92 {strides = array<i32>} : memref<128x256xf32, #tpu.memory_space<vmem>>, vector<128x256xf32>,
    return
  }
  func.func @transform_0(%arg0: i32, %arg1: i32) -> (i32, i32, i32) {
    %c0_i32 = arith.constant 0 : i32
    %c0_i32_0 = arith.constant 0 : i32
    %c0_i32_1 = arith.constant 0 : i32
    return %arg1, %c0_i32, %c0_i32_0 : i32, i32, i32
  }
  func.func @transform_1(%arg0: i32, %arg1: i32) -> (i32, i32, i32) {
    %c0_i32 = arith.constant 0 : i32
    %c0_i32_0 = arith.constant 0 : i32
    %c0_i32_1 = arith.constant 0 : i32
    return %c0_i32, %c0_i32_0, %arg0 : i32, i32, i32
  }
  func.func @transform_2(%arg0: i32, %arg1: i32) -> (i32, i32) {
    %c0_i32 = arith.constant 0 : i32
    %c0_i32_0 = arith.constant 0 : i32
    return %c0_i32, %arg0 : i32, i32
  }
  func.func @transform_3(%arg0: i32, %arg1: i32) -> (i32, i32) {
    %c0_i32 = arith.constant 0 : i32
    return %arg1, %arg0 : i32, i32
  }
}

</mosaic_0001>

<llo_original>
// kernel: cnn_transposed_layer_forward.1
$region0: #{cnn_transposed_layer_forward.1}
  #allocation0 [shape = 'u32[]', space=smem, size = 0x4, offset = 0x4, fixed_abs, tag = 'smem constant byte address 0x4 - core index']
  #allocation1 [shape = 'u32[144,128]{1,0:T(1,128)}', space=vmem, size = 0x12000, scoped, tag = 'internal scratch']
  %s0 = inlined_call_operand.vmem [shape: bf16[4,162,4], index: 0, kind: input, shape index: {}]
  %s1 = inlined_call_operand.vmem [shape: bf16[9,4,256], index: 1, kind: input, shape index: {}]
  %s2 = inlined_call_operand.vmem [shape: f32[1,256], index: 2, kind: input, shape index: {}]
  %s3 = inlined_call_operand.vmem [shape: f32[512,256], index: 3, kind: output, shape index: {}]
  %s4 = sld [smem:[#allocation0]]
  $region45: #{cnn_transposed_layer_forward.1} parent=0
    _
  %s6 = ssub.s32 1, %s4
  %s7 = scalar_select 0, %s6, %s4
  loop: start=0, step=1, limit=6
  $region2: #{cnn_transposed_layer_forward.1} parent=0 // loop_pre_header
    _
  $region3: #{cnn_transposed_layer_forward.1} parent=0 // loop_header
    %s9 = sphi 0, %s13
    %p10 = scmp.ge.s32.totalorder %s9, 6
    %s16 = sphi 0, %s28
    %s17 = sphi 0, %s24
    %s18 = sphi 0, %s16
    %s19 = sphi 0, %s17
    %s20 = sphi 0, %s18
    %s21 = sphi 0, %s19
    %s31 = sphi 0, %s33
    %s34 = sphi 0, %s31
    %s35 = sphi 0, %s34
    %s51 = sphi 0, %s35
    %s57 = sphi 0, %s59
    %s60 = sphi 0, %s57
    %s61 = sphi 0, %s60
    %s77 = sphi 0, %s61
    %s83 = sphi 0, %s85
    %s86 = sphi 0, %s83
    %s87 = sphi 0, %s86
    %s103 = sphi 0, %s87
    %s111 = sphi 0, %s113
    %s114 = sphi 0, %s111
    %s115 = sphi 0, %s114
    %s131 = sphi 0, %s115
  $region4: #{cnn_transposed_layer_forward.1} parent=0 // loop_header_branch
    %12 = sbr.rel (%p10) target = $region8
  $region5: #{cnn_transposed_layer_forward.1} parent=0 // loop_body
    %s14 = ssub.s32 %s9, 1
    %s15 = ssub.s32 %s9, 2
    %s22 = sadd.s32 1, %s17
    %p23 = scmp.ge.s32.totalorder %s22, 4
    %s24 = scalar_select %p23, 0, %s22
    %s25 = sadd.s32 1, %s16
    %s26 = scalar_select %p23, %s25, %s16
    %p27 = scmp.ge.s32.totalorder %s26, 1
    %s28 = scalar_select %p27, 0, %s26
    %s29 = ssub.s32 %s17, %s24
    %p30 = scmp.eq.s32.totalorder %s29, 0
    %s32 = sadd.s32 %s31, 1
    %s33 = scalar_select %p30, %s31, %s32
    %p36 = pneg %p30
    %p37 = scmp.eq.s32.totalorder %s9, 3
    %p38 = por %p36, %p37
    %p39 = scmp.ne.s32.totalorder %s31, %s34
    %p40 = scmp.eq.s32.totalorder %s9, 0
    %p41 = por %p39, %p40
    %p42 = scmp.ne.s32.totalorder %s31, %s34
    %p43 = scmp.eq.s32.totalorder %s14, 3
    %p44 = por %p42, %p43
    %p45 = scmp.ne.s32.totalorder %s34, %s35
    %p46 = scmp.eq.s32.totalorder %s14, 0
    %p47 = por %p45, %p46
    %p48 = scmp.ne.s32.totalorder %s34, %s35
    %p49 = scmp.eq.s32.totalorder %s15, 3
    %p50 = por %p48, %p49
    %p52 = scmp.ne.s32.totalorder %s35, %s51
    %p53 = scmp.eq.s32.totalorder %s15, 0
    %p54 = por %p52, %p53
    %s55 = ssub.s32 %s16, %s28
    %p56 = scmp.eq.s32.totalorder %s55, 0
    %s58 = sadd.s32 %s57, 1
    %s59 = scalar_select %p56, %s57, %s58
    %p62 = pneg %p56
    %p63 = scmp.eq.s32.totalorder %s9, 3
    %p64 = por %p62, %p63
    %p65 = scmp.ne.s32.totalorder %s57, %s60
    %p66 = scmp.eq.s32.totalorder %s9, 0
    %p67 = por %p65, %p66
    %p68 = scmp.ne.s32.totalorder %s57, %s60
    %p69 = scmp.eq.s32.totalorder %s14, 3
    %p70 = por %p68, %p69
    %p71 = scmp.ne.s32.totalorder %s60, %s61
    %p72 = scmp.eq.s32.totalorder %s14, 0
    %p73 = por %p71, %p72
    %p74 = scmp.ne.s32.totalorder %s60, %s61
    %p75 = scmp.eq.s32.totalorder %s15, 3
    %p76 = por %p74, %p75
    %p78 = scmp.ne.s32.totalorder %s61, %s77
    %p79 = scmp.eq.s32.totalorder %s15, 0
    %p80 = por %p78, %p79
    %s81 = ssub.s32 %s16, %s28
    %p82 = scmp.eq.s32.totalorder %s81, 0
    %s84 = sadd.s32 %s83, 1
    %s85 = scalar_select %p82, %s83, %s84
    %p88 = pneg %p82
    %p89 = scmp.eq.s32.totalorder %s9, 3
    %p90 = por %p88, %p89
    %p91 = scmp.ne.s32.totalorder %s83, %s86
    %p92 = scmp.eq.s32.totalorder %s9, 0
    %p93 = por %p91, %p92
    %p94 = scmp.ne.s32.totalorder %s83, %s86
    %p95 = scmp.eq.s32.totalorder %s14, 3
    %p96 = por %p94, %p95
    %p97 = scmp.ne.s32.totalorder %s86, %s87
    %p98 = scmp.eq.s32.totalorder %s14, 0
    %p99 = por %p97, %p98
    %p100 = scmp.ne.s32.totalorder %s86, %s87
    %p101 = scmp.eq.s32.totalorder %s15, 3
    %p102 = por %p100, %p101
    %p104 = scmp.ne.s32.totalorder %s87, %s103
    %p105 = scmp.eq.s32.totalorder %s15, 0
    %p106 = por %p104, %p105
    %s107 = ssub.s32 %s17, %s24
    %s108 = ssub.s32 %s16, %s28
    %s109 = sor.u32 %s107, %s108
    %p110 = scmp.eq.s32.totalorder %s109, 0
    %s112 = sadd.s32 %s111, 1
    %s113 = scalar_select %p110, %s111, %s112
    %p116 = pneg %p110
    %p117 = scmp.eq.s32.totalorder %s9, 3
    %p118 = por %p116, %p117
    %p119 = scmp.ne.s32.totalorder %s111, %s114
    %p120 = scmp.eq.s32.totalorder %s9, 0
    %p121 = por %p119, %p120
    %p122 = scmp.ne.s32.totalorder %s111, %s114
    %p123 = scmp.eq.s32.totalorder %s14, 3
    %p124 = por %p122, %p123
    %p125 = scmp.ne.s32.totalorder %s114, %s115
    %p126 = scmp.eq.s32.totalorder %s14, 0
    %p127 = por %p125, %p126
    %p128 = scmp.ne.s32.totalorder %s114, %s115
    %p129 = scmp.eq.s32.totalorder %s15, 3
    %p130 = por %p128, %p129
    %p132 = scmp.ne.s32.totalorder %s115, %s131
    %p133 = scmp.eq.s32.totalorder %s15, 0
    %p134 = por %p132, %p133
    %p135 = scmp.le.s32.totalorder 1, %s9
    %p136 = scmp.lt.s32.totalorder %s9, 5
    %p137 = pnand %p135, %p136
    %p138 = pneg %p137
    // Predicated region
    $region9: #{cnn_transposed_layer_forward.1} parent=5 // pred_check
      _
    $region10: #{cnn_transposed_layer_forward.1} parent=5 // pred_check_branch
      %140 = sbr.rel (%p137) target = $region12
    $region11: #{cnn_transposed_layer_forward.1} parent=5 // pred_region
      %s141 = ssub.s32 %s9, 1
      // Predicated region
      $region13: #{cnn_transposed_layer_forward.1} parent=11 // pred_check
        %p142 = pneg %p73
      $region14: #{cnn_transposed_layer_forward.1} parent=11 // pred_check_branch
        %144 = sbr.rel (%p142) target = $region16
      $region15: #{cnn_transposed_layer_forward.1} parent=11 // pred_region
        %s145 = smul.u32 2, %s18
        %p146 = scmp.lt.s32.totalorder %s145, 1
        %s147 = scalar_select %p146, %s145, 1
        %s148 = smul.addr %s147, 2
        %s149 = scalar_lea.vmem %s1, %s148
        %s150 = smul.u32 2, %s18
      $region16: #{cnn_transposed_layer_forward.1} parent=11 // pred_fallthru
        _
      // Predicated region
      $region17: #{cnn_transposed_layer_forward.1} parent=11 // pred_check
        %p151 = pneg %p99
      $region18: #{cnn_transposed_layer_forward.1} parent=11 // pred_check_branch
        %153 = sbr.rel (%p151) target = $region20
      $region19: #{cnn_transposed_layer_forward.1} parent=11 // pred_region
        %s154 = smul.u32 2, %s18
        %p155 = scmp.lt.s32.totalorder %s154, 1
        %s156 = scalar_select %p155, %s154, 1
        %s157 = scalar_lea.vmem %s2, %s156
        %s158 = smul.u32 2, %s18
      $region20: #{cnn_transposed_layer_forward.1} parent=11 // pred_fallthru
        _
    $region12: #{cnn_transposed_layer_forward.1} parent=5 // pred_fallthru
      _
    %p159 = scmp.lt.s32.totalorder %s9, 4
    // Predicated region
    $region21: #{cnn_transposed_layer_forward.1} parent=5 // pred_check
      %p160 = pneg %p159
    $region22: #{cnn_transposed_layer_forward.1} parent=5 // pred_check_branch
      %162 = sbr.rel (%p160) target = $region24
    $region23: #{cnn_transposed_layer_forward.1} parent=5 // pred_region
      // Predicated region
      $region25: #{cnn_transposed_layer_forward.1} parent=23 // pred_check
        %p163 = pneg %p41
      $region26: #{cnn_transposed_layer_forward.1} parent=23 // pred_check_branch
        %165 = sbr.rel (%p163) target = $region28
      $region27: #{cnn_transposed_layer_forward.1} parent=23 // pred_region
        %p166 = scmp.lt.s32.totalorder %s17, 3
        %s167 = scalar_select %p166, %s17, 3
        %s168 = smul.addr %s167, 21
        %s169 = smul.addr %s168, 4
        %s170 = scalar_lea.vmem %s0, %s169
      $region28: #{cnn_transposed_layer_forward.1} parent=23 // pred_fallthru
        _
    $region24: #{cnn_transposed_layer_forward.1} parent=5 // pred_fallthru
      _
    %p171 = scmp.le.s32.totalorder 1, %s9
    %p172 = scmp.lt.s32.totalorder %s9, 5
    %p173 = pnand %p171, %p172
    %p174 = pneg %p173
    // Predicated region
    $region29: #{cnn_transposed_layer_forward.1} parent=5 // pred_check
      _
    $region30: #{cnn_transposed_layer_forward.1} parent=5 // pred_check_branch
      %176 = sbr.rel (%p173) target = $region32
    $region31: #{cnn_transposed_layer_forward.1} parent=5 // pred_region
      %s177 = ssub.s32 %s9, 1
      %p178 = scmp.lt.s32.totalorder %s19, 3
      %s179 = scalar_select %p178, %s19, 3
      %s180 = smul.addr %s179, 21
      %s181 = smul.addr %s180, 4
      %s182 = scalar_lea.vmem %s0, %s181
      %p183 = pneg %p47
      %p184 = pneg %p44
      %s185 = smul.u32 2, %s18
      %p186 = scmp.lt.s32.totalorder %s185, 1
      %s187 = scalar_select %p186, %s185, 1
      %s188 = smul.addr %s187, 2
      %s189 = scalar_lea.vmem %s1, %s188
      %p190 = pneg %p73
      %p191 = pneg %p70
      %s192 = smul.u32 2, %s18
      %p193 = scmp.lt.s32.totalorder %s192, 1
      %s194 = scalar_select %p193, %s192, 1
      %s195 = scalar_lea.vmem %s2, %s194
      %p196 = pneg %p99
      %p197 = pneg %p96
      %p198 = pneg %p127
      %p199 = pneg %p124
      %s200 = smul.u32 16, %s19
      %s201 = smul.u32 2, %s18
      %p202 = scmp.lt.s32.totalorder %s200, 63
      %s203 = scalar_select %p202, %s200, 63
      %p204 = scmp.lt.s32.totalorder %s201, 1
      %s205 = scalar_select %p204, %s201, 1
      %s206 = smul.addr %s203, 2
      %s207 = sadd.s32 %s205, %s206
      %s208 = smul.addr %s207, 8
      %s209 = scalar_lea.vmem %s3, %s208
      %p210 = scmp.lt.s32.totalorder %s19, 3
      %s211 = scalar_select %p210, %s19, 3
      %s212 = smul.addr %s211, 21
      %s213 = smul.addr %s212, 4
      %s214 = scalar_lea.vmem %s0, %s213
      %s215 = smul.u32 2, %s18
      %p216 = scmp.lt.s32.totalorder %s215, 1
      %s217 = scalar_select %p216, %s215, 1
      %s218 = smul.addr %s217, 2
      %s219 = scalar_lea.vmem %s1, %s218
      %s220 = smul.u32 2, %s18
      %s221 = smul.u32 2, %s18
      %p222 = scmp.lt.s32.totalorder %s221, 1
      %s223 = scalar_select %p222, %s221, 1
      %s224 = scalar_lea.vmem %s2, %s223
      %s225 = smul.u32 2, %s18
      %s226 = smul.u32 16, %s19
      %s227 = smul.u32 2, %s18
      %p228 = scmp.lt.s32.totalorder %s226, 63
      %s229 = scalar_select %p228, %s226, 63
      %p230 = scmp.lt.s32.totalorder %s227, 1
      %s231 = scalar_select %p230, %s227, 1
      %s232 = smul.addr %s229, 2
      %s233 = sadd.s32 %s231, %s232
      %s234 = smul.addr %s233, 8
      %s235 = scalar_lea.vmem %s3, %s234
      %s236 = smul.u32 16, %s19
      %s237 = smul.u32 2, %s18
      %v241 = vlaneseq
      %v242 = vshrl.u32 %v241, 7
      %v243 = vadd.s32 %v242, 8
      %v244 = vadd.s32 %v242, 16
      %v245 = vadd.s32 %v242, 24
      %v246 = vadd.s32 %v242, 32
      %v247 = vadd.s32 %v242, 40
      %v248 = vadd.s32 %v242, 48
      %v249 = vadd.s32 %v242, 56
      %v250 = vadd.s32 %v242, 64
      %v251 = vadd.s32 %v242, 72
      %v252 = vadd.s32 %v242, 80
      %v253 = vadd.s32 %v242, 88
      %v254 = vadd.s32 %v242, 96
      %v255 = vadd.s32 %v242, 104
      %v256 = vadd.s32 %v242, 112
      %v257 = vadd.s32 %v242, 120
      %vm258 = vcmp.lt.s32.totalorder %v242, 0
      %v259 = vsub.s32 0, %v242
      %v260 = vsel %vm258, %v259, %v242
      %v261 = vshrl.u32 %v260, 4
      %v262 = vand.u32 %v260, 15
      %v263 = vsub.s32 0, %v262
      %v264 = vsel %vm258, %v263, %v262
      %vm265 = vcmp.lt.s32.totalorder %v243, 0
      %v266 = vsub.s32 0, %v243
      %v267 = vsel %vm265, %v266, %v243
      %v268 = vshrl.u32 %v267, 4
      %v269 = vand.u32 %v267, 15
      %v270 = vsub.s32 0, %v269
      %v271 = vsel %vm265, %v270, %v269
      %vm272 = vcmp.lt.s32.totalorder %v244, 0
      %v273 = vsub.s32 0, %v244
      %v274 = vsel %vm272, %v273, %v244
      %v275 = vshrl.u32 %v274, 4
      %v276 = vand.u32 %v274, 15
      %v277 = vsub.s32 0, %v276
      %v278 = vsel %vm272, %v277, %v276
      %vm279 = vcmp.lt.s32.totalorder %v245, 0
      %v280 = vsub.s32 0, %v245
      %v281 = vsel %vm279, %v280, %v245
      %v282 = vshrl.u32 %v281, 4
      %v283 = vand.u32 %v281, 15
      %v284 = vsub.s32 0, %v283
      %v285 = vsel %vm279, %v284, %v283
      %vm286 = vcmp.lt.s32.totalorder %v246, 0
      %v287 = vsub.s32 0, %v246
      %v288 = vsel %vm286, %v287, %v246
      %v289 = vshrl.u32 %v288, 4
      %v290 = vand.u32 %v288, 15
      %v291 = vsub.s32 0, %v290
      %v292 = vsel %vm286, %v291, %v290
      %vm293 = vcmp.lt.s32.totalorder %v247, 0
      %v294 = vsub.s32 0, %v247
      %v295 = vsel %vm293, %v294, %v247
      %v296 = vshrl.u32 %v295, 4
      %v297 = vand.u32 %v295, 15
      %v298 = vsub.s32 0, %v297
      %v299 = vsel %vm293, %v298, %v297
      %vm300 = vcmp.lt.s32.totalorder %v248, 0
      %v301 = vsub.s32 0, %v248
      %v302 = vsel %vm300, %v301, %v248
      %v303 = vshrl.u32 %v302, 4
      %v304 = vand.u32 %v302, 15
      %v305 = vsub.s32 0, %v304
      %v306 = vsel %vm300, %v305, %v304
      %vm307 = vcmp.lt.s32.totalorder %v249, 0
      %v308 = vsub.s32 0, %v249
      %v309 = vsel %vm307, %v308, %v249
      %v310 = vshrl.u32 %v309, 4
      %v311 = vand.u32 %v309, 15
      %v312 = vsub.s32 0, %v311
      %v313 = vsel %vm307, %v312, %v311
      %vm314 = vcmp.lt.s32.totalorder %v250, 0
      %v315 = vsub.s32 0, %v250
      %v316 = vsel %vm314, %v315, %v250
      %v317 = vshrl.u32 %v316, 4
      %v318 = vand.u32 %v316, 15
      %v319 = vsub.s32 0, %v318
      %v320 = vsel %vm314, %v319, %v318
      %vm321 = vcmp.lt.s32.totalorder %v251, 0
      %v322 = vsub.s32 0, %v251
      %v323 = vsel %vm321, %v322, %v251
      %v324 = vshrl.u32 %v323, 4
      %v325 = vand.u32 %v323, 15
      %v326 = vsub.s32 0, %v325
      %v327 = vsel %vm321, %v326, %v325
      %vm328 = vcmp.lt.s32.totalorder %v252, 0
      %v329 = vsub.s32 0, %v252
      %v330 = vsel %vm328, %v329, %v252
      %v331 = vshrl.u32 %v330, 4
      %v332 = vand.u32 %v330, 15
      %v333 = vsub.s32 0, %v332
      %v334 = vsel %vm328, %v333, %v332
      %vm335 = vcmp.lt.s32.totalorder %v253, 0
      %v336 = vsub.s32 0, %v253
      %v337 = vsel %vm335, %v336, %v253
      %v338 = vshrl.u32 %v337, 4
      %v339 = vand.u32 %v337, 15
      %v340 = vsub.s32 0, %v339
      %v341 = vsel %vm335, %v340, %v339
      %vm342 = vcmp.lt.s32.totalorder %v254, 0
      %v343 = vsub.s32 0, %v254
      %v344 = vsel %vm342, %v343, %v254
      %v345 = vshrl.u32 %v344, 4
      %v346 = vand.u32 %v344, 15
      %v347 = vsub.s32 0, %v346
      %v348 = vsel %vm342, %v347, %v346
      %vm349 = vcmp.lt.s32.totalorder %v255, 0
      %v350 = vsub.s32 0, %v255
      %v351 = vsel %vm349, %v350, %v255
      %v352 = vshrl.u32 %v351, 4
      %v353 = vand.u32 %v351, 15
      %v354 = vsub.s32 0, %v353
      %v355 = vsel %vm349, %v354, %v353
      %vm356 = vcmp.lt.s32.totalorder %v256, 0
      %v357 = vsub.s32 0, %v256
      %v358 = vsel %vm356, %v357, %v256
      %v359 = vshrl.u32 %v358, 4
      %v360 = vand.u32 %v358, 15
      %v361 = vsub.s32 0, %v360
      %v362 = vsel %vm356, %v361, %v360
      %vm363 = vcmp.lt.s32.totalorder %v257, 0
      %v364 = vsub.s32 0, %v257
      %v365 = vsel %vm363, %v364, %v257
      %v366 = vshrl.u32 %v365, 4
      %v367 = vand.u32 %v365, 15
      %v368 = vsub.s32 0, %v367
      %v369 = vsel %vm363, %v368, %v367
      %vm370 = vcmp.ne.s32.totalorder %v264, 0
      %vm371 = vcmp.ne.s32.totalorder %v271, 0
      %vm372 = vcmp.ne.s32.totalorder %v278, 0
      %vm373 = vcmp.ne.s32.totalorder %v285, 0
      %vm374 = vcmp.ne.s32.totalorder %v292, 0
      %vm375 = vcmp.ne.s32.totalorder %v299, 0
      %vm376 = vcmp.ne.s32.totalorder %v306, 0
      %vm377 = vcmp.ne.s32.totalorder %v313, 0
      %vm378 = vcmp.ne.s32.totalorder %v320, 0
      %vm379 = vcmp.ne.s32.totalorder %v327, 0
      %vm380 = vcmp.ne.s32.totalorder %v334, 0
      %vm381 = vcmp.ne.s32.totalorder %v341, 0
      %vm382 = vcmp.ne.s32.totalorder %v348, 0
      %vm383 = vcmp.ne.s32.totalorder %v355, 0
      %vm384 = vcmp.ne.s32.totalorder %v362, 0
      %vm385 = vcmp.ne.s32.totalorder %v369, 0
      %vm386 = vcmp.lt.s32.totalorder %v264, 0
      %vm387 = vcmp.lt.s32.totalorder %v271, 0
      %vm388 = vcmp.lt.s32.totalorder %v278, 0
      %vm389 = vcmp.lt.s32.totalorder %v285, 0
      %vm390 = vcmp.lt.s32.totalorder %v292, 0
      %vm391 = vcmp.lt.s32.totalorder %v299, 0
      %vm392 = vcmp.lt.s32.totalorder %v306, 0
      %vm393 = vcmp.lt.s32.totalorder %v313, 0
      %vm394 = vcmp.lt.s32.totalorder %v320, 0
      %vm395 = vcmp.lt.s32.totalorder %v327, 0
      %vm396 = vcmp.lt.s32.totalorder %v334, 0
      %vm397 = vcmp.lt.s32.totalorder %v341, 0
      %vm398 = vcmp.lt.s32.totalorder %v348, 0
      %vm399 = vcmp.lt.s32.totalorder %v355, 0
      %vm400 = vcmp.lt.s32.totalorder %v362, 0
      %vm401 = vcmp.lt.s32.totalorder %v369, 0
      %vm402 = vmand %vm386, %vm370
      %vm403 = vmand %vm387, %vm371
      %vm404 = vmand %vm388, %vm372
      %vm405 = vmand %vm389, %vm373
      %vm406 = vmand %vm390, %vm374
      %vm407 = vmand %vm391, %vm375
      %vm408 = vmand %vm392, %vm376
      %vm409 = vmand %vm393, %vm377
      %vm410 = vmand %vm394, %vm378
      %vm411 = vmand %vm395, %vm379
      %vm412 = vmand %vm396, %vm380
      %vm413 = vmand %vm397, %vm381
      %vm414 = vmand %vm398, %vm382
      %vm415 = vmand %vm399, %vm383
      %vm416 = vmand %vm400, %vm384
      %vm417 = vmand %vm401, %vm385
      %v418 = vadd.s32 %v264, 16
      %v419 = vadd.s32 %v271, 16
      %v420 = vadd.s32 %v278, 16
      %v421 = vadd.s32 %v285, 16
      %v422 = vadd.s32 %v292, 16
      %v423 = vadd.s32 %v299, 16
      %v424 = vadd.s32 %v306, 16
      %v425 = vadd.s32 %v313, 16
      %v426 = vadd.s32 %v320, 16
      %v427 = vadd.s32 %v327, 16
      %v428 = vadd.s32 %v334, 16
      %v429 = vadd.s32 %v341, 16
      %v430 = vadd.s32 %v348, 16
      %v431 = vadd.s32 %v355, 16
      %v432 = vadd.s32 %v362, 16
      %v433 = vadd.s32 %v369, 16
      %v434 = vsel %vm402, %v418, %v264
      %v435 = vsel %vm403, %v419, %v271
      %v436 = vsel %vm404, %v420, %v278
      %v437 = vsel %vm405, %v421, %v285
      %v438 = vsel %vm406, %v422, %v292
      %v439 = vsel %vm407, %v423, %v299
      %v440 = vsel %vm408, %v424, %v306
      %v441 = vsel %vm409, %v425, %v313
      %v442 = vsel %vm410, %v426, %v320
      %v443 = vsel %vm411, %v427, %v327
      %v444 = vsel %vm412, %v428, %v334
      %v445 = vsel %vm413, %v429, %v341
      %v446 = vsel %vm414, %v430, %v348
      %v447 = vsel %vm415, %v431, %v355
      %v448 = vsel %vm416, %v432, %v362
      %v449 = vsel %vm417, %v433, %v369
      %vm450 = vcmp.ne.s32.totalorder %v434, 0
      %vm451 = vcmp.ne.s32.totalorder %v435, 0
      %vm452 = vcmp.ne.s32.totalorder %v436, 0
      %vm453 = vcmp.ne.s32.totalorder %v437, 0
      %vm454 = vcmp.ne.s32.totalorder %v438, 0
      %vm455 = vcmp.ne.s32.totalorder %v439, 0
      %vm456 = vcmp.ne.s32.totalorder %v440, 0
      %vm457 = vcmp.ne.s32.totalorder %v441, 0
      %vm458 = vcmp.ne.s32.totalorder %v442, 0
      %vm459 = vcmp.ne.s32.totalorder %v443, 0
      %vm460 = vcmp.ne.s32.totalorder %v444, 0
      %vm461 = vcmp.ne.s32.totalorder %v445, 0
      %vm462 = vcmp.ne.s32.totalorder %v446, 0
      %vm463 = vcmp.ne.s32.totalorder %v447, 0
      %vm464 = vcmp.ne.s32.totalorder %v448, 0
      %vm465 = vcmp.ne.s32.totalorder %v449, 0
      %vm466 = vcmp.ne.s32.totalorder %v434, 15
      %vm467 = vcmp.ne.s32.totalorder %v435, 15
      %vm468 = vcmp.ne.s32.totalorder %v436, 15
      %vm469 = vcmp.ne.s32.totalorder %v437, 15
      %vm470 = vcmp.ne.s32.totalorder %v438, 15
      %vm471 = vcmp.ne.s32.totalorder %v439, 15
      %vm472 = vcmp.ne.s32.totalorder %v440, 15
      %vm473 = vcmp.ne.s32.totalorder %v441, 15
      %vm474 = vcmp.ne.s32.totalorder %v442, 15
      %vm475 = vcmp.ne.s32.totalorder %v443, 15
      %vm476 = vcmp.ne.s32.totalorder %v444, 15
      %vm477 = vcmp.ne.s32.totalorder %v445, 15
      %vm478 = vcmp.ne.s32.totalorder %v446, 15
      %vm479 = vcmp.ne.s32.totalorder %v447, 15
      %vm480 = vcmp.ne.s32.totalorder %v448, 15
      %vm481 = vcmp.ne.s32.totalorder %v449, 15
      %v482 = vld [vmem:[%s214] sm:$0xf]
      %v483 = vld [vmem:[%s214 + $0x4] sm:$0xf]
      %v484 = vld [vmem:[%s214 + $0x8] sm:$0xf]
      %v485 = vld [vmem:[%s214 + $0xc] sm:$0xf]
      %v486 = vld [vmem:[%s214 + $0x10] sm:$0xf]
      %v487 = vld [vmem:[%s214 + $0x14] sm:$0xf]
      %v488 = vld [vmem:[%s214 + $0x18] sm:$0xf]
      %v489 = vld [vmem:[%s214 + $0x1c] sm:$0xf]
      %v490 = vld [vmem:[%s214 + $0x20] sm:$0xf]
      %v491 = vld [vmem:[%s214 + $0x24] sm:$0xf]
      %v492 = vld [vmem:[%s214 + $0x28] sm:$0xf]
      %v493 = vld [vmem:[%s214 + $0x2c] sm:$0xf]
      %v494 = vld [vmem:[%s214 + $0x30] sm:$0xf]
      %v495 = vld [vmem:[%s214 + $0x34] sm:$0xf]
      %v496 = vld [vmem:[%s214 + $0x38] sm:$0xf]
      %v497 = vld [vmem:[%s214 + $0x3c] sm:$0xf]
      %vm498 = vmpackc.low %vm450, %vm450
      %vm499 = vmpackc.low %vm451, %vm451
      %vm500 = vmpackc.low %vm452, %vm452
      %vm501 = vmpackc.low %vm453, %vm453
      %vm502 = vmpackc.low %vm454, %vm454
      %vm503 = vmpackc.low %vm455, %vm455
      %vm504 = vmpackc.low %vm456, %vm456
      %vm505 = vmpackc.low %vm457, %vm457
      %vm506 = vmpackc.low %vm458, %vm458
      %vm507 = vmpackc.low %vm459, %vm459
      %vm508 = vmpackc.low %vm460, %vm460
      %vm509 = vmpackc.low %vm461, %vm461
      %vm510 = vmpackc.low %vm462, %vm462
      %vm511 = vmpackc.low %vm463, %vm463
      %vm512 = vmpackc.low %vm464, %vm464
      %vm513 = vmpackc.low %vm465, %vm465
      %v514 = vsel %vm498, %v482, 0
      %v515 = vsel %vm499, %v483, 0
      %v516 = vsel %vm500, %v484, 0
      %v517 = vsel %vm501, %v485, 0
      %v518 = vsel %vm502, %v486, 0
      %v519 = vsel %vm503, %v487, 0
      %v520 = vsel %vm504, %v488, 0
      %v521 = vsel %vm505, %v489, 0
      %v522 = vsel %vm506, %v490, 0
      %v523 = vsel %vm507, %v491, 0
      %v524 = vsel %vm508, %v492, 0
      %v525 = vsel %vm509, %v493, 0
      %v526 = vsel %vm510, %v494, 0
      %v527 = vsel %vm511, %v495, 0
      %v528 = vsel %vm512, %v496, 0
      %v529 = vsel %vm513, %v497, 0
      %v530 = vld [vmem:[%s219] sm:$0xf]
      %v531 = vld [vmem:[%s214 + $0x40] sm:$0x1]
      %s532 = scalar_lea.vmem %s219, 4
      %v533 = vld [vmem:[%s532] sm:$0xf]
      %v551 = vunpack.c.l.b16 %v482
      %v552 = vunpack.c.l.b16 %v483
      %v553 = vunpack.c.l.b16 %v484
      %v554 = vunpack.c.l.b16 %v485
      %v555 = vunpack.c.l.b16 %v486
      %v556 = vunpack.c.l.b16 %v487
      %v557 = vunpack.c.l.b16 %v488
      %v558 = vunpack.c.l.b16 %v489
      %v559 = vunpack.c.l.b16 %v490
      %v560 = vunpack.c.l.b16 %v491
      %v561 = vunpack.c.l.b16 %v492
      %v562 = vunpack.c.l.b16 %v493
      %v563 = vunpack.c.l.b16 %v494
      %v564 = vunpack.c.l.b16 %v495
      %v565 = vunpack.c.l.b16 %v496
      %v566 = vunpack.c.l.b16 %v497
      %v567 = vunpack.c.l.b16 %v531
      %v568 = vpack.c.b16 %v552, %v551
      %v569 = vpack.c.b16 %v554, %v553
      %v570 = vpack.c.b16 %v556, %v555
      %v571 = vpack.c.b16 %v558, %v557
      %v572 = vpack.c.b16 %v560, %v559
      %v573 = vpack.c.b16 %v562, %v561
      %v574 = vpack.c.b16 %v564, %v563
      %v575 = vpack.c.b16 %v566, %v565
      %v576 = vpack.c.b16 %v567, %v567
      %vm577 = vsmask.f32 7424
      %v579 = vshrl.u32 %v568, 16
      %v581 = vshll.u32 %v568, 16
      %v583 = vrot.slane %v581, 1
      %v584 = vor.u32 %v579, %v583
      %v586 = vshll.u32 %v569, 16
      %v588 = vrot.slane %v586, 1
      %v589 = vsel %vm577, %v584, %v588
      %v590 = vshrl.u32 %v569, 16
      %v592 = vor.u32 %v590, %v588
      %v594 = vshll.u32 %v570, 16
      %v596 = vrot.slane %v594, 1
      %v597 = vsel %vm577, %v592, %v596
      %v598 = vshrl.u32 %v570, 16
      %v600 = vor.u32 %v598, %v596
      %v602 = vshll.u32 %v571, 16
      %v604 = vrot.slane %v602, 1
      %v605 = vsel %vm577, %v600, %v604
      %v606 = vshrl.u32 %v571, 16
      %v608 = vor.u32 %v606, %v604
      %v610 = vshll.u32 %v572, 16
      %v612 = vrot.slane %v610, 1
      %v613 = vsel %vm577, %v608, %v612
      %v614 = vshrl.u32 %v572, 16
      %v616 = vor.u32 %v614, %v612
      %v618 = vshll.u32 %v573, 16
      %v620 = vrot.slane %v618, 1
      %v621 = vsel %vm577, %v616, %v620
      %v622 = vshrl.u32 %v573, 16
      %v624 = vor.u32 %v622, %v620
      %v626 = vshll.u32 %v574, 16
      %v628 = vrot.slane %v626, 1
      %v629 = vsel %vm577, %v624, %v628
      %v630 = vshrl.u32 %v574, 16
      %v632 = vor.u32 %v630, %v628
      %v634 = vshll.u32 %v575, 16
      %v636 = vrot.slane %v634, 1
      %v637 = vsel %vm577, %v632, %v636
      %v638 = vshrl.u32 %v575, 16
      %v640 = vor.u32 %v638, %v636
      %v642 = vshll.u32 %v576, 16
      %v644 = vrot.slane %v642, 1
      %v645 = vsel %vm577, %v640, %v644
      %v648 = vunpack.c.l.s4 1983009808
      %v649 = vunpack.c.0.s8 %v648
      %v650 = vlaneseq
      %v651 = vshrl.u32 %v650, 7
      %v652 = vsub.s32 %v649, %v651
      %v653 = vrot.slane %v533, %v652
      %v654 = vcombine.high %v653, %v653
      %vm655 = vcmask 31744
      %v657 = vsel %vm655, %v589, 0
      %v660 = vsel %vm655, %v597, 0
      %v663 = vsel %vm655, %v605, 0
      %v666 = vsel %vm655, %v613, 0
      %v669 = vsel %vm655, %v621, 0
      %v672 = vsel %vm655, %v629, 0
      %v675 = vsel %vm655, %v637, 0
      %v678 = vsel %vm655, %v645, 0
      %vm680 = vcmask 1041408
      %v682 = vsel %vm680, %v653, 0
      %v685 = vsel %vm680, %v654, 0
      %687 = vmatprep.subr.bf16.mxu0 %v685
      %688 = vmatpush1.bf16.msra.mxu0 %v682
      %689 = vmatprep.subr.bf16.mxu0 0
      %690 = vmatpush1.bf16.msra.mxu0 0
      %691 = vmatprep.subr.bf16.mxu0 0
      %692 = vmatpush1.bf16.msra.mxu0 0
      %693 = vmatprep.subr.bf16.mxu0 0
      %694 = vmatpush1.bf16.msra.mxu0 0
      %695 = vmatprep.subr.bf16.mxu0 0
      %696 = vmatpush1.bf16.msra.mxu0 0
      %697 = vmatprep.subr.bf16.mxu0 0
      %698 = vmatpush1.bf16.msra.mxu0 0
      %699 = vmatprep.subr.bf16.mxu0 0
      %700 = vmatpush1.bf16.msra.mxu0 0
      %701 = vmatprep.subr.bf16.mxu0 0
      %702 = vmatpush1.bf16.msra.mxu0 0
      %703 = vmatprep.subr.bf16.mxu0 0
      %704 = vmatpush1.bf16.msra.mxu0 0
      %705 = vmatprep.subr.bf16.mxu0 0
      %706 = vmatpush1.bf16.msra.mxu0 0
      %707 = vmatprep.subr.bf16.mxu0 0
      %708 = vmatpush1.bf16.msra.mxu0 0
      %709 = vmatprep.subr.bf16.mxu0 0
      %710 = vmatpush1.bf16.msra.mxu0 0
      %711 = vmatprep.subr.bf16.mxu0 0
      %712 = vmatpush1.bf16.msra.mxu0 0
      %713 = vmatprep.subr.bf16.mxu0 0
      %714 = vmatpush1.bf16.msra.mxu0 0
      %715 = vmatprep.subr.bf16.mxu0 0
      %716 = vmatpush1.bf16.msra.mxu0 0
      %717 = vmatprep.subr.bf16.mxu0 0
      %718 = vmatpush1.bf16.msra.mxu0 0
      %719 = vmatprep.mubr.bf16.mxu0 0
      %720 = vmatmul.mubr.bf16.gmra.mrb[0].mxu0 %v657
      %v721 = vpop.f32.mrb[0].mxu0
      %v722 = vadd.f32 0.0, %v721
      %v723 = vpop.f32.mrb[0].mxu0
      %v724 = vadd.f32 0.0, %v723
      %v725 = vpop.f32.mrb[0].mxu0
      %v726 = vadd.f32 0.0, %v725
      %v727 = vpop.f32.mrb[0].mxu0
      %v728 = vadd.f32 0.0, %v727
      %729 = vmatprep.mubr.bf16.mxu0 0
      %730 = vmatmul.mubr.bf16.gmra.mrb[0].mxu0 %v660
      %v731 = vpop.f32.mrb[0].mxu0
      %v732 = vadd.f32 0.0, %v731
      %v733 = vpop.f32.mrb[0].mxu0
      %v734 = vadd.f32 0.0, %v733
      %v735 = vpop.f32.mrb[0].mxu0
      %v736 = vadd.f32 0.0, %v735
      %v737 = vpop.f32.mrb[0].mxu0
      %v738 = vadd.f32 0.0, %v737
      %739 = vmatprep.mubr.bf16.mxu0 0
      %740 = vmatmul.mubr.bf16.gmra.mrb[0].mxu0 %v663
      %v741 = vpop.f32.mrb[0].mxu0
      %v742 = vadd.f32 0.0, %v741
      %v743 = vpop.f32.mrb[0].mxu0
      %v744 = vadd.f32 0.0, %v743
      %v745 = vpop.f32.mrb[0].mxu0
      %v746 = vadd.f32 0.0, %v745
      %v747 = vpop.f32.mrb[0].mxu0
      %v748 = vadd.f32 0.0, %v747
      %749 = vmatprep.mubr.bf16.mxu0 0
      %750 = vmatmul.mubr.bf16.gmra.mrb[0].mxu0 %v666
      %v751 = vpop.f32.mrb[0].mxu0
      %v752 = vadd.f32 0.0, %v751
      %v753 = vpop.f32.mrb[0].mxu0
      %v754 = vadd.f32 0.0, %v753
      %v755 = vpop.f32.mrb[0].mxu0
      %v756 = vadd.f32 0.0, %v755
      %v757 = vpop.f32.mrb[0].mxu0
      %v758 = vadd.f32 0.0, %v757
      %759 = vmatprep.mubr.bf16.mxu0 0
      %760 = vmatmul.mubr.bf16.gmra.mrb[0].mxu0 %v669
      %v761 = vpop.f32.mrb[0].mxu0
      %v762 = vadd.f32 0.0, %v761
      %v763 = vpop.f32.mrb[0].mxu0
      %v764 = vadd.f32 0.0, %v763
      %v765 = vpop.f32.mrb[0].mxu0
      %v766 = vadd.f32 0.0, %v765
      %v767 = vpop.f32.mrb[0].mxu0
      %v768 = vadd.f32 0.0, %v767
      %769 = vmatprep.mubr.bf16.mxu0 0
      %770 = vmatmul.mubr.bf16.gmra.mrb[0].mxu0 %v672
      %v771 = vpop.f32.mrb[0].mxu0
      %v772 = vadd.f32 0.0, %v771
      %v773 = vpop.f32.mrb[0].mxu0
      %v774 = vadd.f32 0.0, %v773
      %v775 = vpop.f32.mrb[0].mxu0
      %v776 = vadd.f32 0.0, %v775
      %v777 = vpop.f32.mrb[0].mxu0
      %v778 = vadd.f32 0.0, %v777
      %779 = vmatprep.mubr.bf16.mxu0 0
      %780 = vmatmul.mubr.bf16.gmra.mrb[0].mxu0 %v675
      %v781 = vpop.f32.mrb[0].mxu0
      %v782 = vadd.f32 0.0, %v781
      %v783 = vpop.f32.mrb[0].mxu0
      %v784 = vadd.f32 0.0, %v783
      %v785 = vpop.f32.mrb[0].mxu0
      %v786 = vadd.f32 0.0, %v785
      %v787 = vpop.f32.mrb[0].mxu0
      %v788 = vadd.f32 0.0, %v787
      %789 = vmatprep.mubr.bf16.mxu0 0
      %790 = vmatmul.mubr.bf16.gmra.mrb[0].mxu0 %v678
      %v791 = vpop.f32.mrb[0].mxu0
      %v792 = vadd.f32 0.0, %v791
      %v793 = vpop.f32.mrb[0].mxu0
      %v794 = vadd.f32 0.0, %v793
      %v795 = vpop.f32.mrb[0].mxu0
      %v796 = vadd.f32 0.0, %v795
      %v797 = vpop.f32.mrb[0].mxu0
      %v798 = vadd.f32 0.0, %v797
      %799 = vdwg.mxu0
      %v816 = vunpack.c.l.b16 %v514
      %v817 = vunpack.c.l.b16 %v515
      %v818 = vunpack.c.l.b16 %v516
      %v819 = vunpack.c.l.b16 %v517
      %v820 = vunpack.c.l.b16 %v518
      %v821 = vunpack.c.l.b16 %v519
      %v822 = vunpack.c.l.b16 %v520
      %v823 = vunpack.c.l.b16 %v521
      %v824 = vunpack.c.l.b16 %v522
      %v825 = vunpack.c.l.b16 %v523
      %v826 = vunpack.c.l.b16 %v524
      %v827 = vunpack.c.l.b16 %v525
      %v828 = vunpack.c.l.b16 %v526
      %v829 = vunpack.c.l.b16 %v527
      %v830 = vunpack.c.l.b16 %v528
      %v831 = vunpack.c.l.b16 %v529
      %v832 = vpack.c.b16 %v817, %v816
      %v833 = vpack.c.b16 %v819, %v818
      %v834 = vpack.c.b16 %v821, %v820
      %v835 = vpack.c.b16 %v823, %v822
      %v836 = vpack.c.b16 %v825, %v824
      %v837 = vpack.c.b16 %v827, %v826
      %v838 = vpack.c.b16 %v829, %v828
      %v839 = vpack.c.b16 %v831, %v830
      %v842 = vunpack.c.l.s4 1983009808
      %v843 = vunpack.c.0.s8 %v842
      %v844 = vlaneseq
      %v845 = vshrl.u32 %v844, 7
      %v846 = vsub.s32 %v843, %v845
      %v847 = vrot.slane %v530, %v846
      %v848 = vcombine.high %v847, %v847
      %v850 = vsel %vm655, %v832, 0
      %v853 = vsel %vm655, %v833, 0
      %v856 = vsel %vm655, %v834, 0
      %v859 = vsel %vm655, %v835, 0
      %v862 = vsel %vm655, %v836, 0
      %v865 = vsel %vm655, %v837, 0
      %v868 = vsel %vm655, %v838, 0
      %v871 = vsel %vm655, %v839, 0
      %v874 = vsel %vm680, %v847, 0
      %v877 = vsel %vm680, %v848, 0
      %879 = vmatprep.subr.bf16.mxu0 %v877
      %880 = vmatpush1.bf16.msra.mxu0 %v874
      %881 = vmatprep.subr.bf16.mxu0 0
      %882 = vmatpush1.bf16.msra.mxu0 0
      %883 = vmatprep.subr.bf16.mxu0 0
      %884 = vmatpush1.bf16.msra.mxu0 0
      %885 = vmatprep.subr.bf16.mxu0 0
      %886 = vmatpush1.bf16.msra.mxu0 0
      %887 = vmatprep.subr.bf16.mxu0 0
      %888 = vmatpush1.bf16.msra.mxu0 0
      %889 = vmatprep.subr.bf16.mxu0 0
      %890 = vmatpush1.bf16.msra.mxu0 0
      %891 = vmatprep.subr.bf16.mxu0 0
      %892 = vmatpush1.bf16.msra.mxu0 0
      %893 = vmatprep.subr.bf16.mxu0 0
      %894 = vmatpush1.bf16.msra.mxu0 0
      %895 = vmatprep.subr.bf16.mxu0 0
      %896 = vmatpush1.bf16.msra.mxu0 0
      %897 = vmatprep.subr.bf16.mxu0 0
      %898 = vmatpush1.bf16.msra.mxu0 0
      %899 = vmatprep.subr.bf16.mxu0 0
      %900 = vmatpush1.bf16.msra.mxu0 0
      %901 = vmatprep.subr.bf16.mxu0 0
      %902 = vmatpush1.bf16.msra.mxu0 0
      %903 = vmatprep.subr.bf16.mxu0 0
      %904 = vmatpush1.bf16.msra.mxu0 0
      %905 = vmatprep.subr.bf16.mxu0 0
      %906 = vmatpush1.bf16.msra.mxu0 0
      %907 = vmatprep.subr.bf16.mxu0 0
      %908 = vmatpush1.bf16.msra.mxu0 0
      %909 = vmatprep.subr.bf16.mxu0 0
      %910 = vmatpush1.bf16.msra.mxu0 0
      %911 = vmatprep.mubr.bf16.mxu0 0
      %912 = vmatmul.mubr.bf16.gmra.mrb[0].mxu0 %v850
      %v913 = vpop.f32.mrb[0].mxu0
      %v914 = vadd.f32 %v722, %v913
      %v915 = vpop.f32.mrb[0].mxu0
      %v916 = vadd.f32 %v724, %v915
      %v917 = vpop.f32.mrb[0].mxu0
      %v918 = vadd.f32 %v726, %v917
      %v919 = vpop.f32.mrb[0].mxu0
      %v920 = vadd.f32 %v728, %v919
      %921 = vmatprep.mubr.bf16.mxu0 0
      %922 = vmatmul.mubr.bf16.gmra.mrb[0].mxu0 %v853
      %v923 = vpop.f32.mrb[0].mxu0
      %v924 = vadd.f32 %v732, %v923
      %v925 = vpop.f32.mrb[0].mxu0
      %v926 = vadd.f32 %v734, %v925
      %v927 = vpop.f32.mrb[0].mxu0
      %v928 = vadd.f32 %v736, %v927
      %v929 = vpop.f32.mrb[0].mxu0
      %v930 = vadd.f32 %v738, %v929
      %931 = vmatprep.mubr.bf16.mxu0 0
      %932 = vmatmul.mubr.bf16.gmra.mrb[0].mxu0 %v856
      %v933 = vpop.f32.mrb[0].mxu0
      %v934 = vadd.f32 %v742, %v933
      %v935 = vpop.f32.mrb[0].mxu0
      %v936 = vadd.f32 %v744, %v935
      %v937 = vpop.f32.mrb[0].mxu0
      %v938 = vadd.f32 %v746, %v937
      %v939 = vpop.f32.mrb[0].mxu0
      %v940 = vadd.f32 %v748, %v939
      %941 = vmatprep.mubr.bf16.mxu0 0
      %942 = vmatmul.mubr.bf16.gmra.mrb[0].mxu0 %v859
      %v943 = vpop.f32.mrb[0].mxu0
      %v944 = vadd.f32 %v752, %v943
      %v945 = vpop.f32.mrb[0].mxu0
      %v946 = vadd.f32 %v754, %v945
      %v947 = vpop.f32.mrb[0].mxu0
      %v948 = vadd.f32 %v756, %v947
      %v949 = vpop.f32.mrb[0].mxu0
      %v950 = vadd.f32 %v758, %v949
      %951 = vmatprep.mubr.bf16.mxu0 0
      %952 = vmatmul.mubr.bf16.gmra.mrb[0].mxu0 %v862
      %v953 = vpop.f32.mrb[0].mxu0
      %v954 = vadd.f32 %v762, %v953
      %v955 = vpop.f32.mrb[0].mxu0
      %v956 = vadd.f32 %v764, %v955
      %v957 = vpop.f32.mrb[0].mxu0
      %v958 = vadd.f32 %v766, %v957
      %v959 = vpop.f32.mrb[0].mxu0
      %v960 = vadd.f32 %v768, %v959
      %961 = vmatprep.mubr.bf16.mxu0 0
      %962 = vmatmul.mubr.bf16.gmra.mrb[0].mxu0 %v865
      %v963 = vpop.f32.mrb[0].mxu0
      %v964 = vadd.f32 %v772, %v963
      %v965 = vpop.f32.mrb[0].mxu0
      %v966 = vadd.f32 %v774, %v965
      %v967 = vpop.f32.mrb[0].mxu0
      %v968 = vadd.f32 %v776, %v967
      %v969 = vpop.f32.mrb[0].mxu0
      %v970 = vadd.f32 %v778, %v969
      %971 = vmatprep.mubr.bf16.mxu0 0
      %972 = vmatmul.mubr.bf16.gmra.mrb[0].mxu0 %v868
      %v973 = vpop.f32.mrb[0].mxu0
      %v974 = vadd.f32 %v782, %v973
      %v975 = vpop.f32.mrb[0].mxu0
      %v976 = vadd.f32 %v784, %v975
      %v977 = vpop.f32.mrb[0].mxu0
      %v978 = vadd.f32 %v786, %v977
      %v979 = vpop.f32.mrb[0].mxu0
      %v980 = vadd.f32 %v788, %v979
      %981 = vmatprep.mubr.bf16.mxu0 0
      %982 = vmatmul.mubr.bf16.gmra.mrb[0].mxu0 %v871
      %v983 = vpop.f32.mrb[0].mxu0
      %v984 = vadd.f32 %v792, %v983
      %v985 = vpop.f32.mrb[0].mxu0
      %v986 = vadd.f32 %v794, %v985
      %v987 = vpop.f32.mrb[0].mxu0
      %v988 = vadd.f32 %v796, %v987
      %v989 = vpop.f32.mrb[0].mxu0
      %v990 = vadd.f32 %v798, %v989
      %991 = vdwg.mxu0
      %v992 = vld [vmem:[%s214] sm:$0xe]
      %v993 = vld [vmem:[%s214 + $0x4] sm:$0xf]
      %v994 = vld [vmem:[%s214 + $0x8] sm:$0xf]
      %v995 = vld [vmem:[%s214 + $0xc] sm:$0xf]
      %v996 = vld [vmem:[%s214 + $0x10] sm:$0xf]
      %v997 = vld [vmem:[%s214 + $0x14] sm:$0xf]
      %v998 = vld [vmem:[%s214 + $0x18] sm:$0xf]
      %v999 = vld [vmem:[%s214 + $0x1c] sm:$0xf]
      %v1000 = vld [vmem:[%s214 + $0x20] sm:$0xf]
      %v1001 = vld [vmem:[%s214 + $0x24] sm:$0xf]
      %v1002 = vld [vmem:[%s214 + $0x28] sm:$0xf]
      %v1003 = vld [vmem:[%s214 + $0x2c] sm:$0xf]
      %v1004 = vld [vmem:[%s214 + $0x30] sm:$0xf]
      %v1005 = vld [vmem:[%s214 + $0x34] sm:$0xf]
      %v1006 = vld [vmem:[%s214 + $0x38] sm:$0xf]
      %v1007 = vld [vmem:[%s214 + $0x3c] sm:$0xf]
      %v1008 = vld [vmem:[%s214 + $0x40] sm:$0x1]
      %vm1009 = vmpackc.low %vm466, %vm466
      %vm1010 = vmpackc.low %vm467, %vm467
      %vm1011 = vmpackc.low %vm468, %vm468
      %vm1012 = vmpackc.low %vm469, %vm469
      %vm1013 = vmpackc.low %vm470, %vm470
      %vm1014 = vmpackc.low %vm471, %vm471
      %vm1015 = vmpackc.low %vm472, %vm472
      %vm1016 = vmpackc.low %vm473, %vm473
      %vm1017 = vmpackc.low %vm474, %vm474
      %vm1018 = vmpackc.low %vm475, %vm475
      %vm1019 = vmpackc.low %vm476, %vm476
      %vm1020 = vmpackc.low %vm477, %vm477
      %vm1021 = vmpackc.low %vm478, %vm478
      %vm1022 = vmpackc.low %vm479, %vm479
      %vm1023 = vmpackc.low %vm480, %vm480
      %vm1024 = vmpackc.low %vm481, %vm481
      %v1025 = vsel %vm1009, 65537, 0
      %v1026 = vsel %vm1010, 65537, 0
      %v1027 = vsel %vm1011, 65537, 0
      %v1028 = vsel %vm1012, 65537, 0
      %v1029 = vsel %vm1013, 65537, 0
      %v1030 = vsel %vm1014, 65537, 0
      %v1031 = vsel %vm1015, 65537, 0
      %v1032 = vsel %vm1016, 65537, 0
      %v1033 = vsel %vm1017, 65537, 0
      %v1034 = vsel %vm1018, 65537, 0
      %v1035 = vsel %vm1019, 65537, 0
      %v1036 = vsel %vm1020, 65537, 0
      %v1037 = vsel %vm1021, 65537, 0
      %v1038 = vsel %vm1022, 65537, 0
      %v1039 = vsel %vm1023, 65537, 0
      %v1040 = vsel %vm1024, 65537, 0
      %vm1041 = vcmask 1040384
      %vm1042 = vcmask 1044484
      %vm1043 = vmor %vm1041, %vm1042
      %v1044 = vrot.slane %v1025, 7
      %v1045 = vrot.slane %v1044, 4
      %v1046 = vrot.slane %v1026, 7
      %v1047 = vsel %vm1043, %v1045, %v1046
      %v1048 = vrot.slane %v1046, 4
      %v1049 = vrot.slane %v1027, 7
      %v1050 = vsel %vm1043, %v1048, %v1049
      %v1051 = vrot.slane %v1049, 4
      %v1052 = vrot.slane %v1028, 7
      %v1053 = vsel %vm1043, %v1051, %v1052
      %v1054 = vrot.slane %v1052, 4
      %v1055 = vrot.slane %v1029, 7
      %v1056 = vsel %vm1043, %v1054, %v1055
      %v1057 = vrot.slane %v1055, 4
      %v1058 = vrot.slane %v1030, 7
      %v1059 = vsel %vm1043, %v1057, %v1058
      %v1060 = vrot.slane %v1058, 4
      %v1061 = vrot.slane %v1031, 7
      %v1062 = vsel %vm1043, %v1060, %v1061
      %v1063 = vrot.slane %v1061, 4
      %v1064 = vrot.slane %v1032, 7
      %v1065 = vsel %vm1043, %v1063, %v1064
      %v1066 = vrot.slane %v1064, 4
      %v1067 = vrot.slane %v1033, 7
      %v1068 = vsel %vm1043, %v1066, %v1067
      %v1069 = vrot.slane %v1067, 4
      %v1070 = vrot.slane %v1034, 7
      %v1071 = vsel %vm1043, %v1069, %v1070
      %v1072 = vrot.slane %v1070, 4
      %v1073 = vrot.slane %v1035, 7
      %v1074 = vsel %vm1043, %v1072, %v1073
      %v1075 = vrot.slane %v1073, 4
      %v1076 = vrot.slane %v1036, 7
      %v1077 = vsel %vm1043, %v1075, %v1076
      %v1078 = vrot.slane %v1076, 4
      %v1079 = vrot.slane %v1037, 7
      %v1080 = vsel %vm1043, %v1078, %v1079
      %v1081 = vrot.slane %v1079, 4
      %v1082 = vrot.slane %v1038, 7
      %v1083 = vsel %vm1043, %v1081, %v1082
      %v1084 = vrot.slane %v1082, 4
      %v1085 = vrot.slane %v1039, 7
      %v1086 = vsel %vm1043, %v1084, %v1085
      %v1087 = vrot.slane %v1085, 4
      %v1088 = vrot.slane %v1040, 7
      %v1089 = vsel %vm1043, %v1087, %v1088
      %v1090 = vrot.slane %v1088, 4
      %vm1091 = vcmp.ne.s16.totalorder %v1044, 0
      %vm1092 = vcmp.ne.s16.totalorder %v1047, 0
      %vm1093 = vcmp.ne.s16.totalorder %v1050, 0
      %vm1094 = vcmp.ne.s16.totalorder %v1053, 0
      %vm1095 = vcmp.ne.s16.totalorder %v1056, 0
      %vm1096 = vcmp.ne.s16.totalorder %v1059, 0
      %vm1097 = vcmp.ne.s16.totalorder %v1062, 0
      %vm1098 = vcmp.ne.s16.totalorder %v1065, 0
      %vm1099 = vcmp.ne.s16.totalorder %v1068, 0
      %vm1100 = vcmp.ne.s16.totalorder %v1071, 0
      %vm1101 = vcmp.ne.s16.totalorder %v1074, 0
      %vm1102 = vcmp.ne.s16.totalorder %v1077, 0
      %vm1103 = vcmp.ne.s16.totalorder %v1080, 0
      %vm1104 = vcmp.ne.s16.totalorder %v1083, 0
      %vm1105 = vcmp.ne.s16.totalorder %v1086, 0
      %vm1106 = vcmp.ne.s16.totalorder %v1089, 0
      %vm1107 = vcmp.ne.s16.totalorder %v1090, 0
      %v1108 = vsel %vm1091, %v992, 0
      %v1109 = vsel %vm1092, %v993, 0
      %v1110 = vsel %vm1093, %v994, 0
      %v1111 = vsel %vm1094, %v995, 0
      %v1112 = vsel %vm1095, %v996, 0
      %v1113 = vsel %vm1096, %v997, 0
      %v1114 = vsel %vm1097, %v998, 0
      %v1115 = vsel %vm1098, %v999, 0
      %v1116 = vsel %vm1099, %v1000, 0
      %v1117 = vsel %vm1100, %v1001, 0
      %v1118 = vsel %vm1101, %v1002, 0
      %v1119 = vsel %vm1102, %v1003, 0
      %v1120 = vsel %vm1103, %v1004, 0
      %v1121 = vsel %vm1104, %v1005, 0
      %v1122 = vsel %vm1105, %v1006, 0
      %v1123 = vsel %vm1106, %v1007, 0
      %v1124 = vsel %vm1107, %v1008, 0
      %s1125 = scalar_lea.vmem %s219, 8
      %v1126 = vld [vmem:[%s1125] sm:$0xf]
      %v1144 = vunpack.c.l.b16 %v1108
      %v1145 = vunpack.c.l.b16 %v1109
      %v1146 = vunpack.c.l.b16 %v1110
      %v1147 = vunpack.c.l.b16 %v1111
      %v1148 = vunpack.c.l.b16 %v1112
      %v1149 = vunpack.c.l.b16 %v1113
      %v1150 = vunpack.c.l.b16 %v1114
      %v1151 = vunpack.c.l.b16 %v1115
      %v1152 = vunpack.c.l.b16 %v1116
      %v1153 = vunpack.c.l.b16 %v1117
      %v1154 = vunpack.c.l.b16 %v1118
      %v1155 = vunpack.c.l.b16 %v1119
      %v1156 = vunpack.c.l.b16 %v1120
      %v1157 = vunpack.c.l.b16 %v1121
      %v1158 = vunpack.c.l.b16 %v1122
      %v1159 = vunpack.c.l.b16 %v1123
      %v1160 = vunpack.c.l.b16 %v1124
      %v1161 = vpack.c.b16 %v1145, %v1144
      %v1162 = vpack.c.b16 %v1147, %v1146
      %v1163 = vpack.c.b16 %v1149, %v1148
      %v1164 = vpack.c.b16 %v1151, %v1150
      %v1165 = vpack.c.b16 %v1153, %v1152
      %v1166 = vpack.c.b16 %v1155, %v1154
      %v1167 = vpack.c.b16 %v1157, %v1156
      %v1168 = vpack.c.b16 %v1159, %v1158
      %v1169 = vpack.c.b16 %v1160, %v1160
      %vm1170 = vcmask 1046528
      %v1171 = vrot.slane %v1161, 1
      %v1172 = vrot.slane %v1162, 1
      %v1173 = vsel %vm1170, %v1171, %v1172
      %v1174 = vrot.slane %v1163, 1
      %v1175 = vsel %vm1170, %v1172, %v1174
      %v1176 = vrot.slane %v1164, 1
      %v1177 = vsel %vm1170, %v1174, %v1176
      %v1178 = vrot.slane %v1165, 1
      %v1179 = vsel %vm1170, %v1176, %v1178
      %v1180 = vrot.slane %v1166, 1
      %v1181 = vsel %vm1170, %v1178, %v1180
      %v1182 = vrot.slane %v1167, 1
      %v1183 = vsel %vm1170, %v1180, %v1182
      %v1184 = vrot.slane %v1168, 1
      %v1185 = vsel %vm1170, %v1182, %v1184
      %v1186 = vrot.slane %v1169, 1
      %v1187 = vsel %vm1170, %v1184, %v1186
      %v1190 = vunpack.c.l.s4 1983009808
      %v1191 = vunpack.c.0.s8 %v1190
      %v1192 = vlaneseq
      %v1193 = vshrl.u32 %v1192, 7
      %v1194 = vsub.s32 %v1191, %v1193
      %v1195 = vrot.slane %v1126, %v1194
      %v1196 = vcombine.high %v1195, %v1195
      %v1198 = vsel %vm655, %v1173, 0
      %v1201 = vsel %vm655, %v1175, 0
      %v1204 = vsel %vm655, %v1177, 0
      %v1207 = vsel %vm655, %v1179, 0
      %v1210 = vsel %vm655, %v1181, 0
      %v1213 = vsel %vm655, %v1183, 0
      %v1216 = vsel %vm655, %v1185, 0
      %v1219 = vsel %vm655, %v1187, 0
      %v1222 = vsel %vm680, %v1195, 0
      %v1225 = vsel %vm680, %v1196, 0
      %1227 = vmatprep.subr.bf16.mxu0 %v1225
      %1228 = vmatpush1.bf16.msra.mxu0 %v1222
      %1229 = vmatprep.subr.bf16.mxu0 0
      %1230 = vmatpush1.bf16.msra.mxu0 0
      %1231 = vmatprep.subr.bf16.mxu0 0
      %1232 = vmatpush1.bf16.msra.mxu0 0
      %1233 = vmatprep.subr.bf16.mxu0 0
      %1234 = vmatpush1.bf16.msra.mxu0 0
      %1235 = vmatprep.subr.bf16.mxu0 0
      %1236 = vmatpush1.bf16.msra.mxu0 0
      %1237 = vmatprep.subr.bf16.mxu0 0
      %1238 = vmatpush1.bf16.msra.mxu0 0
      %1239 = vmatprep.subr.bf16.mxu0 0
      %1240 = vmatpush1.bf16.msra.mxu0 0
      %1241 = vmatprep.subr.bf16.mxu0 0
      %1242 = vmatpush1.bf16.msra.mxu0 0
      %1243 = vmatprep.subr.bf16.mxu0 0
      %1244 = vmatpush1.bf16.msra.mxu0 0
      %1245 = vmatprep.subr.bf16.mxu0 0
      %1246 = vmatpush1.bf16.msra.mxu0 0
      %1247 = vmatprep.subr.bf16.mxu0 0
      %1248 = vmatpush1.bf16.msra.mxu0 0
      %1249 = vmatprep.subr.bf16.mxu0 0
      %1250 = vmatpush1.bf16.msra.mxu0 0
      %1251 = vmatprep.subr.bf16.mxu0 0
      %1252 = vmatpush1.bf16.msra.mxu0 0
      %1253 = vmatprep.subr.bf16.mxu0 0
      %1254 = vmatpush1.bf16.msra.mxu0 0
      %1255 = vmatprep.subr.bf16.mxu0 0
      %1256 = vmatpush1.bf16.msra.mxu0 0
      %1257 = vmatprep.subr.bf16.mxu0 0
      %1258 = vmatpush1.bf16.msra.mxu0 0
      %1259 = vmatprep.mubr.bf16.mxu0 0
      %1260 = vmatmul.mubr.bf16.gmra.mrb[0].mxu0 %v1198
      %v1261 = vpop.f32.mrb[0].mxu0
      %v1262 = vadd.f32 0.0, %v1261
      %v1263 = vpop.f32.mrb[0].mxu0
      %v1264 = vadd.f32 0.0, %v1263
      %v1265 = vpop.f32.mrb[0].mxu0
      %v1266 = vadd.f32 0.0, %v1265
      %v1267 = vpop.f32.mrb[0].mxu0
      %v1268 = vadd.f32 0.0, %v1267
      %1269 = vmatprep.mubr.bf16.mxu0 0
      %1270 = vmatmul.mubr.bf16.gmra.mrb[0].mxu0 %v1201
      %v1271 = vpop.f32.mrb[0].mxu0
      %v1272 = vadd.f32 0.0, %v1271
      %v1273 = vpop.f32.mrb[0].mxu0
      %v1274 = vadd.f32 0.0, %v1273
      %v1275 = vpop.f32.mrb[0].mxu0
      %v1276 = vadd.f32 0.0, %v1275
      %v1277 = vpop.f32.mrb[0].mxu0
      %v1278 = vadd.f32 0.0, %v1277
      %1279 = vmatprep.mubr.bf16.mxu0 0
      %1280 = vmatmul.mubr.bf16.gmra.mrb[0].mxu0 %v1204
      %v1281 = vpop.f32.mrb[0].mxu0
      %v1282 = vadd.f32 0.0, %v1281
      %v1283 = vpop.f32.mrb[0].mxu0
      %v1284 = vadd.f32 0.0, %v1283
      %v1285 = vpop.f32.mrb[0].mxu0
      %v1286 = vadd.f32 0.0, %v1285
      %v1287 = vpop.f32.mrb[0].mxu0
      %v1288 = vadd.f32 0.0, %v1287
      %1289 = vmatprep.mubr.bf16.mxu0 0
      %1290 = vmatmul.mubr.bf16.gmra.mrb[0].mxu0 %v1207
      %v1291 = vpop.f32.mrb[0].mxu0
      %v1292 = vadd.f32 0.0, %v1291
      %v1293 = vpop.f32.mrb[0].mxu0
      %v1294 = vadd.f32 0.0, %v1293
      %v1295 = vpop.f32.mrb[0].mxu0
      %v1296 = vadd.f32 0.0, %v1295
      %v1297 = vpop.f32.mrb[0].mxu0
      %v1298 = vadd.f32 0.0, %v1297
      %1299 = vmatprep.mubr.bf16.mxu0 0
      %1300 = vmatmul.mubr.bf16.gmra.mrb[0].mxu0 %v1210
      %v1301 = vpop.f32.mrb[0].mxu0
      %v1302 = vadd.f32 0.0, %v1301
      %v1303 = vpop.f32.mrb[0].mxu0
      %v1304 = vadd.f32 0.0, %v1303
      %v1305 = vpop.f32.mrb[0].mxu0
      %v1306 = vadd.f32 0.0, %v1305
      %v1307 = vpop.f32.mrb[0].mxu0
      %v1308 = vadd.f32 0.0, %v1307
      %1309 = vmatprep.mubr.bf16.mxu0 0
      %1310 = vmatmul.mubr.bf16.gmra.mrb[0].mxu0 %v1213
      %v1311 = vpop.f32.mrb[0].mxu0
      %v1312 = vadd.f32 0.0, %v1311
      %v1313 = vpop.f32.mrb[0].mxu0
      %v1314 = vadd.f32 0.0, %v1313
      %v1315 = vpop.f32.mrb[0].mxu0
      %v1316 = vadd.f32 0.0, %v1315
      %v1317 = vpop.f32.mrb[0].mxu0
      %v1318 = vadd.f32 0.0, %v1317
      %1319 = vmatprep.mubr.bf16.mxu0 0
      %1320 = vmatmul.mubr.bf16.gmra.mrb[0].mxu0 %v1216
      %v1321 = vpop.f32.mrb[0].mxu0
      %v1322 = vadd.f32 0.0, %v1321
      %v1323 = vpop.f32.mrb[0].mxu0
      %v1324 = vadd.f32 0.0, %v1323
      %v1325 = vpop.f32.mrb[0].mxu0
      %v1326 = vadd.f32 0.0, %v1325
      %v1327 = vpop.f32.mrb[0].mxu0
      %v1328 = vadd.f32 0.0, %v1327
      %1329 = vmatprep.mubr.bf16.mxu0 0
      %1330 = vmatmul.mubr.bf16.gmra.mrb[0].mxu0 %v1219
      %v1331 = vpop.f32.mrb[0].mxu0
      %v1332 = vadd.f32 0.0, %v1331
      %v1333 = vpop.f32.mrb[0].mxu0
      %v1334 = vadd.f32 0.0, %v1333
      %v1335 = vpop.f32.mrb[0].mxu0
      %v1336 = vadd.f32 0.0, %v1335
      %v1337 = vpop.f32.mrb[0].mxu0
      %v1338 = vadd.f32 0.0, %v1337
      %1339 = vdwg.mxu0
      %v1340 = vadd.f32 %v914, %v1262
      %v1341 = vadd.f32 %v916, %v1264
      %v1342 = vadd.f32 %v918, %v1266
      %v1343 = vadd.f32 %v920, %v1268
      %v1344 = vadd.f32 %v924, %v1272
      %v1345 = vadd.f32 %v926, %v1274
      %v1346 = vadd.f32 %v928, %v1276
      %v1347 = vadd.f32 %v930, %v1278
      %v1348 = vadd.f32 %v934, %v1282
      %v1349 = vadd.f32 %v936, %v1284
      %v1350 = vadd.f32 %v938, %v1286
      %v1351 = vadd.f32 %v940, %v1288
      %v1352 = vadd.f32 %v944, %v1292
      %v1353 = vadd.f32 %v946, %v1294
      %v1354 = vadd.f32 %v948, %v1296
      %v1355 = vadd.f32 %v950, %v1298
      %v1356 = vadd.f32 %v954, %v1302
      %v1357 = vadd.f32 %v956, %v1304
      %v1358 = vadd.f32 %v958, %v1306
      %v1359 = vadd.f32 %v960, %v1308
      %v1360 = vadd.f32 %v964, %v1312
      %v1361 = vadd.f32 %v966, %v1314
      %v1362 = vadd.f32 %v968, %v1316
      %v1363 = vadd.f32 %v970, %v1318
      %v1364 = vadd.f32 %v974, %v1322
      %v1365 = vadd.f32 %v976, %v1324
      %v1366 = vadd.f32 %v978, %v1326
      %v1367 = vadd.f32 %v980, %v1328
      %v1368 = vadd.f32 %v984, %v1332
      %v1369 = vadd.f32 %v986, %v1334
      %v1370 = vadd.f32 %v988, %v1336
      %v1371 = vadd.f32 %v990, %v1338
      %v1372 = vld [vmem:[%s214 + $0x8] sm:$0xf]
      %v1373 = vld [vmem:[%s214 + $0xc] sm:$0xf]
      %v1374 = vld [vmem:[%s214 + $0x10] sm:$0xf]
      %v1375 = vld [vmem:[%s214 + $0x14] sm:$0xf]
      %v1376 = vld [vmem:[%s214 + $0x18] sm:$0xf]
      %v1377 = vld [vmem:[%s214 + $0x1c] sm:$0xf]
      %v1378 = vld [vmem:[%s214 + $0x20] sm:$0xf]
      %v1379 = vld [vmem:[%s214 + $0x24] sm:$0xf]
      %v1380 = vld [vmem:[%s214 + $0x28] sm:$0xf]
      %v1381 = vld [vmem:[%s214 + $0x2c] sm:$0xf]
      %v1382 = vld [vmem:[%s214 + $0x30] sm:$0xf]
      %v1383 = vld [vmem:[%s214 + $0x34] sm:$0xf]
      %v1384 = vld [vmem:[%s214 + $0x38] sm:$0xf]
      %v1385 = vld [vmem:[%s214 + $0x3c] sm:$0xf]
      %v1386 = vld [vmem:[%s214 + $0x40] sm:$0xf]
      %v1387 = vld [vmem:[%s214 + $0x44] sm:$0xf]
      %v1388 = vsel %vm498, %v1372, 0
      %v1389 = vsel %vm499, %v1373, 0
      %v1390 = vsel %vm500, %v1374, 0
      %v1391 = vsel %vm501, %v1375, 0
      %v1392 = vsel %vm502, %v1376, 0
      %v1393 = vsel %vm503, %v1377, 0
      %v1394 = vsel %vm504, %v1378, 0
      %v1395 = vsel %vm505, %v1379, 0
      %v1396 = vsel %vm506, %v1380, 0
      %v1397 = vsel %vm507, %v1381, 0
      %v1398 = vsel %vm508, %v1382, 0
      %v1399 = vsel %vm509, %v1383, 0
      %v1400 = vsel %vm510, %v1384, 0
      %v1401 = vsel %vm511, %v1385, 0
      %v1402 = vsel %vm512, %v1386, 0
      %v1403 = vsel %vm513, %v1387, 0
      %s1404 = scalar_lea.vmem %s219, 12
      %v1405 = vld [vmem:[%s1404] sm:$0xf]
      %v1422 = vunpack.c.l.b16 %v1388
      %v1423 = vunpack.c.l.b16 %v1389
      %v1424 = vunpack.c.l.b16 %v1390
      %v1425 = vunpack.c.l.b16 %v1391
      %v1426 = vunpack.c.l.b16 %v1392
      %v1427 = vunpack.c.l.b16 %v1393
      %v1428 = vunpack.c.l.b16 %v1394
      %v1429 = vunpack.c.l.b16 %v1395
      %v1430 = vunpack.c.l.b16 %v1396
      %v1431 = vunpack.c.l.b16 %v1397
      %v1432 = vunpack.c.l.b16 %v1398
      %v1433 = vunpack.c.l.b16 %v1399
      %v1434 = vunpack.c.l.b16 %v1400
      %v1435 = vunpack.c.l.b16 %v1401
      %v1436 = vunpack.c.l.b16 %v1402
      %v1437 = vunpack.c.l.b16 %v1403
      %v1438 = vpack.c.b16 %v1423, %v1422
      %v1439 = vpack.c.b16 %v1425, %v1424
      %v1440 = vpack.c.b16 %v1427, %v1426
      %v1441 = vpack.c.b16 %v1429, %v1428
      %v1442 = vpack.c.b16 %v1431, %v1430
      %v1443 = vpack.c.b16 %v1433, %v1432
      %v1444 = vpack.c.b16 %v1435, %v1434
      %v1445 = vpack.c.b16 %v1437, %v1436
      %v1448 = vunpack.c.l.s4 1983009808
      %v1449 = vunpack.c.0.s8 %v1448
      %v1450 = vlaneseq
      %v1451 = vshrl.u32 %v1450, 7
      %v1452 = vsub.s32 %v1449, %v1451
      %v1453 = vrot.slane %v1405, %v1452
      %v1454 = vcombine.high %v1453, %v1453
      %v1456 = vsel %vm655, %v1438, 0
      %v1459 = vsel %vm655, %v1439, 0
      %v1462 = vsel %vm655, %v1440, 0
      %v1465 = vsel %vm655, %v1441, 0
      %v1468 = vsel %vm655, %v1442, 0
      %v1471 = vsel %vm655, %v1443, 0
      %v1474 = vsel %vm655, %v1444, 0
      %v1477 = vsel %vm655, %v1445, 0
      %v1480 = vsel %vm680, %v1453, 0
      %v1483 = vsel %vm680, %v1454, 0
      %1485 = vmatprep.subr.bf16.mxu0 %v1483
      %1486 = vmatpush1.bf16.msra.mxu0 %v1480
      %1487 = vmatprep.subr.bf16.mxu0 0
      %1488 = vmatpush1.bf16.msra.mxu0 0
      %1489 = vmatprep.subr.bf16.mxu0 0
      %1490 = vmatpush1.bf16.msra.mxu0 0
      %1491 = vmatprep.subr.bf16.mxu0 0
      %1492 = vmatpush1.bf16.msra.mxu0 0
      %1493 = vmatprep.subr.bf16.mxu0 0
      %1494 = vmatpush1.bf16.msra.mxu0 0
      %1495 = vmatprep.subr.bf16.mxu0 0
      %1496 = vmatpush1.bf16.msra.mxu0 0
      %1497 = vmatprep.subr.bf16.mxu0 0
      %1498 = vmatpush1.bf16.msra.mxu0 0
      %1499 = vmatprep.subr.bf16.mxu0 0
      %1500 = vmatpush1.bf16.msra.mxu0 0
      %1501 = vmatprep.subr.bf16.mxu0 0
      %1502 = vmatpush1.bf16.msra.mxu0 0
      %1503 = vmatprep.subr.bf16.mxu0 0
      %1504 = vmatpush1.bf16.msra.mxu0 0
      %1505 = vmatprep.subr.bf16.mxu0 0
      %1506 = vmatpush1.bf16.msra.mxu0 0
      %1507 = vmatprep.subr.bf16.mxu0 0
      %1508 = vmatpush1.bf16.msra.mxu0 0
      %1509 = vmatprep.subr.bf16.mxu0 0
      %1510 = vmatpush1.bf16.msra.mxu0 0
      %1511 = vmatprep.subr.bf16.mxu0 0
      %1512 = vmatpush1.bf16.msra.mxu0 0
      %1513 = vmatprep.subr.bf16.mxu0 0
      %1514 = vmatpush1.bf16.msra.mxu0 0
      %1515 = vmatprep.subr.bf16.mxu0 0
      %1516 = vmatpush1.bf16.msra.mxu0 0
      %1517 = vmatprep.mubr.bf16.mxu0 0
      %1518 = vmatmul.mubr.bf16.gmra.mrb[0].mxu0 %v1456
      %v1519 = vpop.f32.mrb[0].mxu0
      %v1520 = vadd.f32 0.0, %v1519
      %v1521 = vpop.f32.mrb[0].mxu0
      %v1522 = vadd.f32 0.0, %v1521
      %v1523 = vpop.f32.mrb[0].mxu0
      %v1524 = vadd.f32 0.0, %v1523
      %v1525 = vpop.f32.mrb[0].mxu0
      %v1526 = vadd.f32 0.0, %v1525
      %1527 = vmatprep.mubr.bf16.mxu0 0
      %1528 = vmatmul.mubr.bf16.gmra.mrb[0].mxu0 %v1459
      %v1529 = vpop.f32.mrb[0].mxu0
      %v1530 = vadd.f32 0.0, %v1529
      %v1531 = vpop.f32.mrb[0].mxu0
      %v1532 = vadd.f32 0.0, %v1531
      %v1533 = vpop.f32.mrb[0].mxu0
      %v1534 = vadd.f32 0.0, %v1533
      %v1535 = vpop.f32.mrb[0].mxu0
      %v1536 = vadd.f32 0.0, %v1535
      %1537 = vmatprep.mubr.bf16.mxu0 0
      %1538 = vmatmul.mubr.bf16.gmra.mrb[0].mxu0 %v1462
      %v1539 = vpop.f32.mrb[0].mxu0
      %v1540 = vadd.f32 0.0, %v1539
      %v1541 = vpop.f32.mrb[0].mxu0
      %v1542 = vadd.f32 0.0, %v1541
      %v1543 = vpop.f32.mrb[0].mxu0
      %v1544 = vadd.f32 0.0, %v1543
      %v1545 = vpop.f32.mrb[0].mxu0
      %v1546 = vadd.f32 0.0, %v1545
      %1547 = vmatprep.mubr.bf16.mxu0 0
      %1548 = vmatmul.mubr.bf16.gmra.mrb[0].mxu0 %v1465
      %v1549 = vpop.f32.mrb[0].mxu0
      %v1550 = vadd.f32 0.0, %v1549
      %v1551 = vpop.f32.mrb[0].mxu0
      %v1552 = vadd.f32 0.0, %v1551
      %v1553 = vpop.f32.mrb[0].mxu0
      %v1554 = vadd.f32 0.0, %v1553
      %v1555 = vpop.f32.mrb[0].mxu0
      %v1556 = vadd.f32 0.0, %v1555
      %1557 = vmatprep.mubr.bf16.mxu0 0
      %1558 = vmatmul.mubr.bf16.gmra.mrb[0].mxu0 %v1468
      %v1559 = vpop.f32.mrb[0].mxu0
      %v1560 = vadd.f32 0.0, %v1559
      %v1561 = vpop.f32.mrb[0].mxu0
      %v1562 = vadd.f32 0.0, %v1561
      %v1563 = vpop.f32.mrb[0].mxu0
      %v1564 = vadd.f32 0.0, %v1563
      %v1565 = vpop.f32.mrb[0].mxu0
      %v1566 = vadd.f32 0.0, %v1565
      %1567 = vmatprep.mubr.bf16.mxu0 0
      %1568 = vmatmul.mubr.bf16.gmra.mrb[0].mxu0 %v1471
      %v1569 = vpop.f32.mrb[0].mxu0
      %v1570 = vadd.f32 0.0, %v1569
      %v1571 = vpop.f32.mrb[0].mxu0
      %v1572 = vadd.f32 0.0, %v1571
      %v1573 = vpop.f32.mrb[0].mxu0
      %v1574 = vadd.f32 0.0, %v1573
      %v1575 = vpop.f32.mrb[0].mxu0
      %v1576 = vadd.f32 0.0, %v1575
      %1577 = vmatprep.mubr.bf16.mxu0 0
      %1578 = vmatmul.mubr.bf16.gmra.mrb[0].mxu0 %v1474
      %v1579 = vpop.f32.mrb[0].mxu0
      %v1580 = vadd.f32 0.0, %v1579
      %v1581 = vpop.f32.mrb[0].mxu0
      %v1582 = vadd.f32 0.0, %v1581
      %v1583 = vpop.f32.mrb[0].mxu0
      %v1584 = vadd.f32 0.0, %v1583
      %v1585 = vpop.f32.mrb[0].mxu0
      %v1586 = vadd.f32 0.0, %v1585
      %1587 = vmatprep.mubr.bf16.mxu0 0
      %1588 = vmatmul.mubr.bf16.gmra.mrb[0].mxu0 %v1477
      %v1589 = vpop.f32.mrb[0].mxu0
      %v1590 = vadd.f32 0.0, %v1589
      %v1591 = vpop.f32.mrb[0].mxu0
      %v1592 = vadd.f32 0.0, %v1591
      %v1593 = vpop.f32.mrb[0].mxu0
      %v1594 = vadd.f32 0.0, %v1593
      %v1595 = vpop.f32.mrb[0].mxu0
      %v1596 = vadd.f32 0.0, %v1595
      %1597 = vdwg.mxu0
      %v1598 = vadd.f32 %v1340, %v1520
      %v1599 = vadd.f32 %v1341, %v1522
      %v1600 = vadd.f32 %v1342, %v1524
      %v1601 = vadd.f32 %v1343, %v1526
      %v1602 = vadd.f32 %v1344, %v1530
      %v1603 = vadd.f32 %v1345, %v1532
      %v1604 = vadd.f32 %v1346, %v1534
      %v1605 = vadd.f32 %v1347, %v1536
      %v1606 = vadd.f32 %v1348, %v1540
      %v1607 = vadd.f32 %v1349, %v1542
      %v1608 = vadd.f32 %v1350, %v1544
      %v1609 = vadd.f32 %v1351, %v1546
      %v1610 = vadd.f32 %v1352, %v1550
      %v1611 = vadd.f32 %v1353, %v1552
      %v1612 = vadd.f32 %v1354, %v1554
      %v1613 = vadd.f32 %v1355, %v1556
      %v1614 = vadd.f32 %v1356, %v1560
      %v1615 = vadd.f32 %v1357, %v1562
      %v1616 = vadd.f32 %v1358, %v1564
      %v1617 = vadd.f32 %v1359, %v1566
      %v1618 = vadd.f32 %v1360, %v1570
      %v1619 = vadd.f32 %v1361, %v1572
      %v1620 = vadd.f32 %v1362, %v1574
      %v1621 = vadd.f32 %v1363, %v1576
      %v1622 = vadd.f32 %v1364, %v1580
      %v1623 = vadd.f32 %v1365, %v1582
      %v1624 = vadd.f32 %v1366, %v1584
      %v1625 = vadd.f32 %v1367, %v1586
      %v1626 = vadd.f32 %v1368, %v1590
      %v1627 = vadd.f32 %v1369, %v1592
      %v1628 = vadd.f32 %v1370, %v1594
      %v1629 = vadd.f32 %v1371, %v1596
      %v1630 = vld [vmem:[%s214 + $0x8] sm:$0xf]
      %v1631 = vld [vmem:[%s214 + $0xc] sm:$0xf]
      %v1632 = vld [vmem:[%s214 + $0x10] sm:$0xf]
      %v1633 = vld [vmem:[%s214 + $0x14] sm:$0xf]
      %v1634 = vld [vmem:[%s214 + $0x18] sm:$0xf]
      %v1635 = vld [vmem:[%s214 + $0x1c] sm:$0xf]
      %v1636 = vld [vmem:[%s214 + $0x20] sm:$0xf]
      %v1637 = vld [vmem:[%s214 + $0x24] sm:$0xf]
      %v1638 = vld [vmem:[%s214 + $0x28] sm:$0xf]
      %v1639 = vld [vmem:[%s214 + $0x2c] sm:$0xf]
      %v1640 = vld [vmem:[%s214 + $0x30] sm:$0xf]
      %v1641 = vld [vmem:[%s214 + $0x34] sm:$0xf]
      %v1642 = vld [vmem:[%s214 + $0x38] sm:$0xf]
      %v1643 = vld [vmem:[%s214 + $0x3c] sm:$0xf]
      %v1644 = vld [vmem:[%s214 + $0x40] sm:$0xf]
      %v1645 = vld [vmem:[%s214 + $0x44] sm:$0xf]
      %v1646 = vld [vmem:[%s214 + $0x48] sm:$0x1]
      %s1647 = scalar_lea.vmem %s219, 16
      %v1648 = vld [vmem:[%s1647] sm:$0xf]
      %v1666 = vunpack.c.l.b16 %v1630
      %v1667 = vunpack.c.l.b16 %v1631
      %v1668 = vunpack.c.l.b16 %v1632
      %v1669 = vunpack.c.l.b16 %v1633
      %v1670 = vunpack.c.l.b16 %v1634
      %v1671 = vunpack.c.l.b16 %v1635
      %v1672 = vunpack.c.l.b16 %v1636
      %v1673 = vunpack.c.l.b16 %v1637
      %v1674 = vunpack.c.l.b16 %v1638
      %v1675 = vunpack.c.l.b16 %v1639
      %v1676 = vunpack.c.l.b16 %v1640
      %v1677 = vunpack.c.l.b16 %v1641
      %v1678 = vunpack.c.l.b16 %v1642
      %v1679 = vunpack.c.l.b16 %v1643
      %v1680 = vunpack.c.l.b16 %v1644
      %v1681 = vunpack.c.l.b16 %v1645
      %v1682 = vunpack.c.l.b16 %v1646
      %v1683 = vpack.c.b16 %v1667, %v1666
      %v1684 = vpack.c.b16 %v1669, %v1668
      %v1685 = vpack.c.b16 %v1671, %v1670
      %v1686 = vpack.c.b16 %v1673, %v1672
      %v1687 = vpack.c.b16 %v1675, %v1674
      %v1688 = vpack.c.b16 %v1677, %v1676
      %v1689 = vpack.c.b16 %v1679, %v1678
      %v1690 = vpack.c.b16 %v1681, %v1680
      %v1691 = vpack.c.b16 %v1682, %v1682
      %v1693 = vshrl.u32 %v1683, 16
      %v1695 = vshll.u32 %v1683, 16
      %v1697 = vrot.slane %v1695, 1
      %v1698 = vor.u32 %v1693, %v1697
      %v1700 = vshll.u32 %v1684, 16
      %v1702 = vrot.slane %v1700, 1
      %v1703 = vsel %vm577, %v1698, %v1702
      %v1704 = vshrl.u32 %v1684, 16
      %v1706 = vor.u32 %v1704, %v1702
      %v1708 = vshll.u32 %v1685, 16
      %v1710 = vrot.slane %v1708, 1
      %v1711 = vsel %vm577, %v1706, %v1710
      %v1712 = vshrl.u32 %v1685, 16
      %v1714 = vor.u32 %v1712, %v1710
      %v1716 = vshll.u32 %v1686, 16
      %v1718 = vrot.slane %v1716, 1
      %v1719 = vsel %vm577, %v1714, %v1718
      %v1720 = vshrl.u32 %v1686, 16
      %v1722 = vor.u32 %v1720, %v1718
      %v1724 = vshll.u32 %v1687, 16
      %v1726 = vrot.slane %v1724, 1
      %v1727 = vsel %vm577, %v1722, %v1726
      %v1728 = vshrl.u32 %v1687, 16
      %v1730 = vor.u32 %v1728, %v1726
      %v1732 = vshll.u32 %v1688, 16
      %v1734 = vrot.slane %v1732, 1
      %v1735 = vsel %vm577, %v1730, %v1734
      %v1736 = vshrl.u32 %v1688, 16
      %v1738 = vor.u32 %v1736, %v1734
      %v1740 = vshll.u32 %v1689, 16
      %v1742 = vrot.slane %v1740, 1
      %v1743 = vsel %vm577, %v1738, %v1742
      %v1744 = vshrl.u32 %v1689, 16
      %v1746 = vor.u32 %v1744, %v1742
      %v1748 = vshll.u32 %v1690, 16
      %v1750 = vrot.slane %v1748, 1
      %v1751 = vsel %vm577, %v1746, %v1750
      %v1752 = vshrl.u32 %v1690, 16
      %v1754 = vor.u32 %v1752, %v1750
      %v1756 = vshll.u32 %v1691, 16
      %v1758 = vrot.slane %v1756, 1
      %v1759 = vsel %vm577, %v1754, %v1758
      %v1762 = vunpack.c.l.s4 1983009808
      %v1763 = vunpack.c.0.s8 %v1762
      %v1764 = vlaneseq
      %v1765 = vshrl.u32 %v1764, 7
      %v1766 = vsub.s32 %v1763, %v1765
      %v1767 = vrot.slane %v1648, %v1766
      %v1768 = vcombine.high %v1767, %v1767
      %v1770 = vsel %vm655, %v1703, 0
      %v1773 = vsel %vm655, %v1711, 0
      %v1776 = vsel %vm655, %v1719, 0
      %v1779 = vsel %vm655, %v1727, 0
      %v1782 = vsel %vm655, %v1735, 0
      %v1785 = vsel %vm655, %v1743, 0
      %v1788 = vsel %vm655, %v1751, 0
      %v1791 = vsel %vm655, %v1759, 0
      %v1794 = vsel %vm680, %v1767, 0
      %v1797 = vsel %vm680, %v1768, 0
      %1799 = vmatprep.subr.bf16.mxu0 %v1797
      %1800 = vmatpush1.bf16.msra.mxu0 %v1794
      %1801 = vmatprep.subr.bf16.mxu0 0
      %1802 = vmatpush1.bf16.msra.mxu0 0
      %1803 = vmatprep.subr.bf16.mxu0 0
      %1804 = vmatpush1.bf16.msra.mxu0 0
      %1805 = vmatprep.subr.bf16.mxu0 0
      %1806 = vmatpush1.bf16.msra.mxu0 0
      %1807 = vmatprep.subr.bf16.mxu0 0
      %1808 = vmatpush1.bf16.msra.mxu0 0
      %1809 = vmatprep.subr.bf16.mxu0 0
      %1810 = vmatpush1.bf16.msra.mxu0 0
      %1811 = vmatprep.subr.bf16.mxu0 0
      %1812 = vmatpush1.bf16.msra.mxu0 0
      %1813 = vmatprep.subr.bf16.mxu0 0
      %1814 = vmatpush1.bf16.msra.mxu0 0
      %1815 = vmatprep.subr.bf16.mxu0 0
      %1816 = vmatpush1.bf16.msra.mxu0 0
      %1817 = vmatprep.subr.bf16.mxu0 0
      %1818 = vmatpush1.bf16.msra.mxu0 0
      %1819 = vmatprep.subr.bf16.mxu0 0
      %1820 = vmatpush1.bf16.msra.mxu0 0
      %1821 = vmatprep.subr.bf16.mxu0 0
      %1822 = vmatpush1.bf16.msra.mxu0 0
      %1823 = vmatprep.subr.bf16.mxu0 0
      %1824 = vmatpush1.bf16.msra.mxu0 0
      %1825 = vmatprep.subr.bf16.mxu0 0
      %1826 = vmatpush1.bf16.msra.mxu0 0
      %1827 = vmatprep.subr.bf16.mxu0 0
      %1828 = vmatpush1.bf16.msra.mxu0 0
      %1829 = vmatprep.subr.bf16.mxu0 0
      %1830 = vmatpush1.bf16.msra.mxu0 0
      %1831 = vmatprep.mubr.bf16.mxu0 0
      %1832 = vmatmul.mubr.bf16.gmra.mrb[0].mxu0 %v1770
      %v1833 = vpop.f32.mrb[0].mxu0
      %v1834 = vadd.f32 0.0, %v1833
      %v1835 = vpop.f32.mrb[0].mxu0
      %v1836 = vadd.f32 0.0, %v1835
      %v1837 = vpop.f32.mrb[0].mxu0
      %v1838 = vadd.f32 0.0, %v1837
      %v1839 = vpop.f32.mrb[0].mxu0
      %v1840 = vadd.f32 0.0, %v1839
      %1841 = vmatprep.mubr.bf16.mxu0 0
      %1842 = vmatmul.mubr.bf16.gmra.mrb[0].mxu0 %v1773
      %v1843 = vpop.f32.mrb[0].mxu0
      %v1844 = vadd.f32 0.0, %v1843
      %v1845 = vpop.f32.mrb[0].mxu0
      %v1846 = vadd.f32 0.0, %v1845
      %v1847 = vpop.f32.mrb[0].mxu0
      %v1848 = vadd.f32 0.0, %v1847
      %v1849 = vpop.f32.mrb[0].mxu0
      %v1850 = vadd.f32 0.0, %v1849
      %1851 = vmatprep.mubr.bf16.mxu0 0
      %1852 = vmatmul.mubr.bf16.gmra.mrb[0].mxu0 %v1776
      %v1853 = vpop.f32.mrb[0].mxu0
      %v1854 = vadd.f32 0.0, %v1853
      %v1855 = vpop.f32.mrb[0].mxu0
      %v1856 = vadd.f32 0.0, %v1855
      %v1857 = vpop.f32.mrb[0].mxu0
      %v1858 = vadd.f32 0.0, %v1857
      %v1859 = vpop.f32.mrb[0].mxu0
      %v1860 = vadd.f32 0.0, %v1859
      %1861 = vmatprep.mubr.bf16.mxu0 0
      %1862 = vmatmul.mubr.bf16.gmra.mrb[0].mxu0 %v1779
      %v1863 = vpop.f32.mrb[0].mxu0
      %v1864 = vadd.f32 0.0, %v1863
      %v1865 = vpop.f32.mrb[0].mxu0
      %v1866 = vadd.f32 0.0, %v1865
      %v1867 = vpop.f32.mrb[0].mxu0
      %v1868 = vadd.f32 0.0, %v1867
      %v1869 = vpop.f32.mrb[0].mxu0
      %v1870 = vadd.f32 0.0, %v1869
      %1871 = vmatprep.mubr.bf16.mxu0 0
      %1872 = vmatmul.mubr.bf16.gmra.mrb[0].mxu0 %v1782
      %v1873 = vpop.f32.mrb[0].mxu0
      %v1874 = vadd.f32 0.0, %v1873
      %v1875 = vpop.f32.mrb[0].mxu0
      %v1876 = vadd.f32 0.0, %v1875
      %v1877 = vpop.f32.mrb[0].mxu0
      %v1878 = vadd.f32 0.0, %v1877
      %v1879 = vpop.f32.mrb[0].mxu0
      %v1880 = vadd.f32 0.0, %v1879
      %1881 = vmatprep.mubr.bf16.mxu0 0
      %1882 = vmatmul.mubr.bf16.gmra.mrb[0].mxu0 %v1785
      %v1883 = vpop.f32.mrb[0].mxu0
      %v1884 = vadd.f32 0.0, %v1883
      %v1885 = vpop.f32.mrb[0].mxu0
      %v1886 = vadd.f32 0.0, %v1885
      %v1887 = vpop.f32.mrb[0].mxu0
      %v1888 = vadd.f32 0.0, %v1887
      %v1889 = vpop.f32.mrb[0].mxu0
      %v1890 = vadd.f32 0.0, %v1889
      %1891 = vmatprep.mubr.bf16.mxu0 0
      %1892 = vmatmul.mubr.bf16.gmra.mrb[0].mxu0 %v1788
      %v1893 = vpop.f32.mrb[0].mxu0
      %v1894 = vadd.f32 0.0, %v1893
      %v1895 = vpop.f32.mrb[0].mxu0
      %v1896 = vadd.f32 0.0, %v1895
      %v1897 = vpop.f32.mrb[0].mxu0
      %v1898 = vadd.f32 0.0, %v1897
      %v1899 = vpop.f32.mrb[0].mxu0
      %v1900 = vadd.f32 0.0, %v1899
      %1901 = vmatprep.mubr.bf16.mxu0 0
      %1902 = vmatmul.mubr.bf16.gmra.mrb[0].mxu0 %v1791
      %v1903 = vpop.f32.mrb[0].mxu0
      %v1904 = vadd.f32 0.0, %v1903
      %v1905 = vpop.f32.mrb[0].mxu0
      %v1906 = vadd.f32 0.0, %v1905
      %v1907 = vpop.f32.mrb[0].mxu0
      %v1908 = vadd.f32 0.0, %v1907
      %v1909 = vpop.f32.mrb[0].mxu0
      %v1910 = vadd.f32 0.0, %v1909
      %1911 = vdwg.mxu0
      %v1912 = vadd.f32 %v1598, %v1834
      %v1913 = vadd.f32 %v1599, %v1836
      %v1914 = vadd.f32 %v1600, %v1838
      %v1915 = vadd.f32 %v1601, %v1840
      %v1916 = vadd.f32 %v1602, %v1844
      %v1917 = vadd.f32 %v1603, %v1846
      %v1918 = vadd.f32 %v1604, %v1848
      %v1919 = vadd.f32 %v1605, %v1850
      %v1920 = vadd.f32 %v1606, %v1854
      %v1921 = vadd.f32 %v1607, %v1856
      %v1922 = vadd.f32 %v1608, %v1858
      %v1923 = vadd.f32 %v1609, %v1860
      %v1924 = vadd.f32 %v1610, %v1864
      %v1925 = vadd.f32 %v1611, %v1866
      %v1926 = vadd.f32 %v1612, %v1868
      %v1927 = vadd.f32 %v1613, %v1870
      %v1928 = vadd.f32 %v1614, %v1874
      %v1929 = vadd.f32 %v1615, %v1876
      %v1930 = vadd.f32 %v1616, %v1878
      %v1931 = vadd.f32 %v1617, %v1880
      %v1932 = vadd.f32 %v1618, %v1884
      %v1933 = vadd.f32 %v1619, %v1886
      %v1934 = vadd.f32 %v1620, %v1888
      %v1935 = vadd.f32 %v1621, %v1890
      %v1936 = vadd.f32 %v1622, %v1894
      %v1937 = vadd.f32 %v1623, %v1896
      %v1938 = vadd.f32 %v1624, %v1898
      %v1939 = vadd.f32 %v1625, %v1900
      %v1940 = vadd.f32 %v1626, %v1904
      %v1941 = vadd.f32 %v1627, %v1906
      %v1942 = vadd.f32 %v1628, %v1908
      %v1943 = vadd.f32 %v1629, %v1910
      %v1944 = vld [vmem:[%s214 + $0x8] sm:$0xe]
      %v1945 = vld [vmem:[%s214 + $0xc] sm:$0xf]
      %v1946 = vld [vmem:[%s214 + $0x10] sm:$0xf]
      %v1947 = vld [vmem:[%s214 + $0x14] sm:$0xf]
      %v1948 = vld [vmem:[%s214 + $0x18] sm:$0xf]
      %v1949 = vld [vmem:[%s214 + $0x1c] sm:$0xf]
      %v1950 = vld [vmem:[%s214 + $0x20] sm:$0xf]
      %v1951 = vld [vmem:[%s214 + $0x24] sm:$0xf]
      %v1952 = vld [vmem:[%s214 + $0x28] sm:$0xf]
      %v1953 = vld [vmem:[%s214 + $0x2c] sm:$0xf]
      %v1954 = vld [vmem:[%s214 + $0x30] sm:$0xf]
      %v1955 = vld [vmem:[%s214 + $0x34] sm:$0xf]
      %v1956 = vld [vmem:[%s214 + $0x38] sm:$0xf]
      %v1957 = vld [vmem:[%s214 + $0x3c] sm:$0xf]
      %v1958 = vld [vmem:[%s214 + $0x40] sm:$0xf]
      %v1959 = vld [vmem:[%s214 + $0x44] sm:$0xf]
      %v1960 = vld [vmem:[%s214 + $0x48] sm:$0x1]
      %v1961 = vsel %vm1091, %v1944, 0
      %v1962 = vsel %vm1092, %v1945, 0
      %v1963 = vsel %vm1093, %v1946, 0
      %v1964 = vsel %vm1094, %v1947, 0
      %v1965 = vsel %vm1095, %v1948, 0
      %v1966 = vsel %vm1096, %v1949, 0
      %v1967 = vsel %vm1097, %v1950, 0
      %v1968 = vsel %vm1098, %v1951, 0
      %v1969 = vsel %vm1099, %v1952, 0
      %v1970 = vsel %vm1100, %v1953, 0
      %v1971 = vsel %vm1101, %v1954, 0
      %v1972 = vsel %vm1102, %v1955, 0
      %v1973 = vsel %vm1103, %v1956, 0
      %v1974 = vsel %vm1104, %v1957, 0
      %v1975 = vsel %vm1105, %v1958, 0
      %v1976 = vsel %vm1106, %v1959, 0
      %v1977 = vsel %vm1107, %v1960, 0
      %s1978 = scalar_lea.vmem %s219, 20
      %v1979 = vld [vmem:[%s1978] sm:$0xf]
      %v1997 = vunpack.c.l.b16 %v1961
      %v1998 = vunpack.c.l.b16 %v1962
      %v1999 = vunpack.c.l.b16 %v1963
      %v2000 = vunpack.c.l.b16 %v1964
      %v2001 = vunpack.c.l.b16 %v1965
      %v2002 = vunpack.c.l.b16 %v1966
      %v2003 = vunpack.c.l.b16 %v1967
      %v2004 = vunpack.c.l.b16 %v1968
      %v2005 = vunpack.c.l.b16 %v1969
      %v2006 = vunpack.c.l.b16 %v1970
      %v2007 = vunpack.c.l.b16 %v1971
      %v2008 = vunpack.c.l.b16 %v1972
      %v2009 = vunpack.c.l.b16 %v1973
      %v2010 = vunpack.c.l.b16 %v1974
      %v2011 = vunpack.c.l.b16 %v1975
      %v2012 = vunpack.c.l.b16 %v1976
      %v2013 = vunpack.c.l.b16 %v1977
      %v2014 = vpack.c.b16 %v1998, %v1997
      %v2015 = vpack.c.b16 %v2000, %v1999
      %v2016 = vpack.c.b16 %v2002, %v2001
      %v2017 = vpack.c.b16 %v2004, %v2003
      %v2018 = vpack.c.b16 %v2006, %v2005
      %v2019 = vpack.c.b16 %v2008, %v2007
      %v2020 = vpack.c.b16 %v2010, %v2009
      %v2021 = vpack.c.b16 %v2012, %v2011
      %v2022 = vpack.c.b16 %v2013, %v2013
      %v2023 = vrot.slane %v2014, 1
      %v2024 = vrot.slane %v2015, 1
      %v2025 = vsel %vm1170, %v2023, %v2024
      %v2026 = vrot.slane %v2016, 1
      %v2027 = vsel %vm1170, %v2024, %v2026
      %v2028 = vrot.slane %v2017, 1
      %v2029 = vsel %vm1170, %v2026, %v2028
      %v2030 = vrot.slane %v2018, 1
      %v2031 = vsel %vm1170, %v2028, %v2030
      %v2032 = vrot.slane %v2019, 1
      %v2033 = vsel %vm1170, %v2030, %v2032
      %v2034 = vrot.slane %v2020, 1
      %v2035 = vsel %vm1170, %v2032, %v2034
      %v2036 = vrot.slane %v2021, 1
      %v2037 = vsel %vm1170, %v2034, %v2036
      %v2038 = vrot.slane %v2022, 1
      %v2039 = vsel %vm1170, %v2036, %v2038
      %v2042 = vunpack.c.l.s4 1983009808
      %v2043 = vunpack.c.0.s8 %v2042
      %v2044 = vlaneseq
      %v2045 = vshrl.u32 %v2044, 7
      %v2046 = vsub.s32 %v2043, %v2045
      %v2047 = vrot.slane %v1979, %v2046
      %v2048 = vcombine.high %v2047, %v2047
      %v2050 = vsel %vm655, %v2025, 0
      %v2053 = vsel %vm655, %v2027, 0
      %v2056 = vsel %vm655, %v2029, 0
      %v2059 = vsel %vm655, %v2031, 0
      %v2062 = vsel %vm655, %v2033, 0
      %v2065 = vsel %vm655, %v2035, 0
      %v2068 = vsel %vm655, %v2037, 0
      %v2071 = vsel %vm655, %v2039, 0
      %v2074 = vsel %vm680, %v2047, 0
      %v2077 = vsel %vm680, %v2048, 0
      %2079 = vmatprep.subr.bf16.mxu0 %v2077
      %2080 = vmatpush1.bf16.msra.mxu0 %v2074
      %2081 = vmatprep.subr.bf16.mxu0 0
      %2082 = vmatpush1.bf16.msra.mxu0 0
      %2083 = vmatprep.subr.bf16.mxu0 0
      %2084 = vmatpush1.bf16.msra.mxu0 0
      %2085 = vmatprep.subr.bf16.mxu0 0
      %2086 = vmatpush1.bf16.msra.mxu0 0
      %2087 = vmatprep.subr.bf16.mxu0 0
      %2088 = vmatpush1.bf16.msra.mxu0 0
      %2089 = vmatprep.subr.bf16.mxu0 0
      %2090 = vmatpush1.bf16.msra.mxu0 0
      %2091 = vmatprep.subr.bf16.mxu0 0
      %2092 = vmatpush1.bf16.msra.mxu0 0
      %2093 = vmatprep.subr.bf16.mxu0 0
      %2094 = vmatpush1.bf16.msra.mxu0 0
      %2095 = vmatprep.subr.bf16.mxu0 0
      %2096 = vmatpush1.bf16.msra.mxu0 0
      %2097 = vmatprep.subr.bf16.mxu0 0
      %2098 = vmatpush1.bf16.msra.mxu0 0
      %2099 = vmatprep.subr.bf16.mxu0 0
      %2100 = vmatpush1.bf16.msra.mxu0 0
      %2101 = vmatprep.subr.bf16.mxu0 0
      %2102 = vmatpush1.bf16.msra.mxu0 0
      %2103 = vmatprep.subr.bf16.mxu0 0
      %2104 = vmatpush1.bf16.msra.mxu0 0
      %2105 = vmatprep.subr.bf16.mxu0 0
      %2106 = vmatpush1.bf16.msra.mxu0 0
      %2107 = vmatprep.subr.bf16.mxu0 0
      %2108 = vmatpush1.bf16.msra.mxu0 0
      %2109 = vmatprep.subr.bf16.mxu0 0
      %2110 = vmatpush1.bf16.msra.mxu0 0
      %2111 = vmatprep.mubr.bf16.mxu0 0
      %2112 = vmatmul.mubr.bf16.gmra.mrb[0].mxu0 %v2050
      %v2113 = vpop.f32.mrb[0].mxu0
      %v2114 = vadd.f32 0.0, %v2113
      %v2115 = vpop.f32.mrb[0].mxu0
      %v2116 = vadd.f32 0.0, %v2115
      %v2117 = vpop.f32.mrb[0].mxu0
      %v2118 = vadd.f32 0.0, %v2117
      %v2119 = vpop.f32.mrb[0].mxu0
      %v2120 = vadd.f32 0.0, %v2119
      %2121 = vmatprep.mubr.bf16.mxu0 0
      %2122 = vmatmul.mubr.bf16.gmra.mrb[0].mxu0 %v2053
      %v2123 = vpop.f32.mrb[0].mxu0
      %v2124 = vadd.f32 0.0, %v2123
      %v2125 = vpop.f32.mrb[0].mxu0
      %v2126 = vadd.f32 0.0, %v2125
      %v2127 = vpop.f32.mrb[0].mxu0
      %v2128 = vadd.f32 0.0, %v2127
      %v2129 = vpop.f32.mrb[0].mxu0
      %v2130 = vadd.f32 0.0, %v2129
      %2131 = vmatprep.mubr.bf16.mxu0 0
      %2132 = vmatmul.mubr.bf16.gmra.mrb[0].mxu0 %v2056
      %v2133 = vpop.f32.mrb[0].mxu0
      %v2134 = vadd.f32 0.0, %v2133
      %v2135 = vpop.f32.mrb[0].mxu0
      %v2136 = vadd.f32 0.0, %v2135
      %v2137 = vpop.f32.mrb[0].mxu0
      %v2138 = vadd.f32 0.0, %v2137
      %v2139 = vpop.f32.mrb[0].mxu0
      %v2140 = vadd.f32 0.0, %v2139
      %2141 = vmatprep.mubr.bf16.mxu0 0
      %2142 = vmatmul.mubr.bf16.gmra.mrb[0].mxu0 %v2059
      %v2143 = vpop.f32.mrb[0].mxu0
      %v2144 = vadd.f32 0.0, %v2143
      %v2145 = vpop.f32.mrb[0].mxu0
      %v2146 = vadd.f32 0.0, %v2145
      %v2147 = vpop.f32.mrb[0].mxu0
      %v2148 = vadd.f32 0.0, %v2147
      %v2149 = vpop.f32.mrb[0].mxu0
      %v2150 = vadd.f32 0.0, %v2149
      %2151 = vmatprep.mubr.bf16.mxu0 0
      %2152 = vmatmul.mubr.bf16.gmra.mrb[0].mxu0 %v2062
      %v2153 = vpop.f32.mrb[0].mxu0
      %v2154 = vadd.f32 0.0, %v2153
      %v2155 = vpop.f32.mrb[0].mxu0
      %v2156 = vadd.f32 0.0, %v2155
      %v2157 = vpop.f32.mrb[0].mxu0
      %v2158 = vadd.f32 0.0, %v2157
      %v2159 = vpop.f32.mrb[0].mxu0
      %v2160 = vadd.f32 0.0, %v2159
      %2161 = vmatprep.mubr.bf16.mxu0 0
      %2162 = vmatmul.mubr.bf16.gmra.mrb[0].mxu0 %v2065
      %v2163 = vpop.f32.mrb[0].mxu0
      %v2164 = vadd.f32 0.0, %v2163
      %v2165 = vpop.f32.mrb[0].mxu0
      %v2166 = vadd.f32 0.0, %v2165
      %v2167 = vpop.f32.mrb[0].mxu0
      %v2168 = vadd.f32 0.0, %v2167
      %v2169 = vpop.f32.mrb[0].mxu0
      %v2170 = vadd.f32 0.0, %v2169
      %2171 = vmatprep.mubr.bf16.mxu0 0
      %2172 = vmatmul.mubr.bf16.gmra.mrb[0].mxu0 %v2068
      %v2173 = vpop.f32.mrb[0].mxu0
      %v2174 = vadd.f32 0.0, %v2173
      %v2175 = vpop.f32.mrb[0].mxu0
      %v2176 = vadd.f32 0.0, %v2175
      %v2177 = vpop.f32.mrb[0].mxu0
      %v2178 = vadd.f32 0.0, %v2177
      %v2179 = vpop.f32.mrb[0].mxu0
      %v2180 = vadd.f32 0.0, %v2179
      %2181 = vmatprep.mubr.bf16.mxu0 0
      %2182 = vmatmul.mubr.bf16.gmra.mrb[0].mxu0 %v2071
      %v2183 = vpop.f32.mrb[0].mxu0
      %v2184 = vadd.f32 0.0, %v2183
      %v2185 = vpop.f32.mrb[0].mxu0
      %v2186 = vadd.f32 0.0, %v2185
      %v2187 = vpop.f32.mrb[0].mxu0
      %v2188 = vadd.f32 0.0, %v2187
      %v2189 = vpop.f32.mrb[0].mxu0
      %v2190 = vadd.f32 0.0, %v2189
      %2191 = vdwg.mxu0
      %v2192 = vadd.f32 %v1912, %v2114
      %v2193 = vadd.f32 %v1913, %v2116
      %v2194 = vadd.f32 %v1914, %v2118
      %v2195 = vadd.f32 %v1915, %v2120
      %v2196 = vadd.f32 %v1916, %v2124
      %v2197 = vadd.f32 %v1917, %v2126
      %v2198 = vadd.f32 %v1918, %v2128
      %v2199 = vadd.f32 %v1919, %v2130
      %v2200 = vadd.f32 %v1920, %v2134
      %v2201 = vadd.f32 %v1921, %v2136
      %v2202 = vadd.f32 %v1922, %v2138
      %v2203 = vadd.f32 %v1923, %v2140
      %v2204 = vadd.f32 %v1924, %v2144
      %v2205 = vadd.f32 %v1925, %v2146
      %v2206 = vadd.f32 %v1926, %v2148
      %v2207 = vadd.f32 %v1927, %v2150
      %v2208 = vadd.f32 %v1928, %v2154
      %v2209 = vadd.f32 %v1929, %v2156
      %v2210 = vadd.f32 %v1930, %v2158
      %v2211 = vadd.f32 %v1931, %v2160
      %v2212 = vadd.f32 %v1932, %v2164
      %v2213 = vadd.f32 %v1933, %v2166
      %v2214 = vadd.f32 %v1934, %v2168
      %v2215 = vadd.f32 %v1935, %v2170
      %v2216 = vadd.f32 %v1936, %v2174
      %v2217 = vadd.f32 %v1937, %v2176
      %v2218 = vadd.f32 %v1938, %v2178
      %v2219 = vadd.f32 %v1939, %v2180
      %v2220 = vadd.f32 %v1940, %v2184
      %v2221 = vadd.f32 %v1941, %v2186
      %v2222 = vadd.f32 %v1942, %v2188
      %v2223 = vadd.f32 %v1943, %v2190
      %v2224 = vld [vmem:[%s214 + $0x10] sm:$0xf]
      %v2225 = vld [vmem:[%s214 + $0x14] sm:$0xf]
      %v2226 = vld [vmem:[%s214 + $0x18] sm:$0xf]
      %v2227 = vld [vmem:[%s214 + $0x1c] sm:$0xf]
      %v2228 = vld [vmem:[%s214 + $0x20] sm:$0xf]
      %v2229 = vld [vmem:[%s214 + $0x24] sm:$0xf]
      %v2230 = vld [vmem:[%s214 + $0x28] sm:$0xf]
      %v2231 = vld [vmem:[%s214 + $0x2c] sm:$0xf]
      %v2232 = vld [vmem:[%s214 + $0x30] sm:$0xf]
      %v2233 = vld [vmem:[%s214 + $0x34] sm:$0xf]
      %v2234 = vld [vmem:[%s214 + $0x38] sm:$0xf]
      %v2235 = vld [vmem:[%s214 + $0x3c] sm:$0xf]
      %v2236 = vld [vmem:[%s214 + $0x40] sm:$0xf]
      %v2237 = vld [vmem:[%s214 + $0x44] sm:$0xf]
      %v2238 = vld [vmem:[%s214 + $0x48] sm:$0xf]
      %v2239 = vld [vmem:[%s214 + $0x4c] sm:$0xf]
      %v2240 = vsel %vm498, %v2224, 0
      %v2241 = vsel %vm499, %v2225, 0
      %v2242 = vsel %vm500, %v2226, 0
      %v2243 = vsel %vm501, %v2227, 0
      %v2244 = vsel %vm502, %v2228, 0
      %v2245 = vsel %vm503, %v2229, 0
      %v2246 = vsel %vm504, %v2230, 0
      %v2247 = vsel %vm505, %v2231, 0
      %v2248 = vsel %vm506, %v2232, 0
      %v2249 = vsel %vm507, %v2233, 0
      %v2250 = vsel %vm508, %v2234, 0
      %v2251 = vsel %vm509, %v2235, 0
      %v2252 = vsel %vm510, %v2236, 0
      %v2253 = vsel %vm511, %v2237, 0
      %v2254 = vsel %vm512, %v2238, 0
      %v2255 = vsel %vm513, %v2239, 0
      %s2256 = scalar_lea.vmem %s219, 24
      %v2257 = vld [vmem:[%s2256] sm:$0xf]
      %v2274 = vunpack.c.l.b16 %v2240
      %v2275 = vunpack.c.l.b16 %v2241
      %v2276 = vunpack.c.l.b16 %v2242
      %v2277 = vunpack.c.l.b16 %v2243
      %v2278 = vunpack.c.l.b16 %v2244
      %v2279 = vunpack.c.l.b16 %v2245
      %v2280 = vunpack.c.l.b16 %v2246
      %v2281 = vunpack.c.l.b16 %v2247
      %v2282 = vunpack.c.l.b16 %v2248
      %v2283 = vunpack.c.l.b16 %v2249
      %v2284 = vunpack.c.l.b16 %v2250
      %v2285 = vunpack.c.l.b16 %v2251
      %v2286 = vunpack.c.l.b16 %v2252
      %v2287 = vunpack.c.l.b16 %v2253
      %v2288 = vunpack.c.l.b16 %v2254
      %v2289 = vunpack.c.l.b16 %v2255
      %v2290 = vpack.c.b16 %v2275, %v2274
      %v2291 = vpack.c.b16 %v2277, %v2276
      %v2292 = vpack.c.b16 %v2279, %v2278
      %v2293 = vpack.c.b16 %v2281, %v2280
      %v2294 = vpack.c.b16 %v2283, %v2282
      %v2295 = vpack.c.b16 %v2285, %v2284
      %v2296 = vpack.c.b16 %v2287, %v2286
      %v2297 = vpack.c.b16 %v2289, %v2288
      %v2300 = vunpack.c.l.s4 1983009808
      %v2301 = vunpack.c.0.s8 %v2300
      %v2302 = vlaneseq
      %v2303 = vshrl.u32 %v2302, 7
      %v2304 = vsub.s32 %v2301, %v2303
      %v2305 = vrot.slane %v2257, %v2304
      %v2306 = vcombine.high %v2305, %v2305
      %v2308 = vsel %vm655, %v2290, 0
      %v2311 = vsel %vm655, %v2291, 0
      %v2314 = vsel %vm655, %v2292, 0
      %v2317 = vsel %vm655, %v2293, 0
      %v2320 = vsel %vm655, %v2294, 0
      %v2323 = vsel %vm655, %v2295, 0
      %v2326 = vsel %vm655, %v2296, 0
      %v2329 = vsel %vm655, %v2297, 0
      %v2332 = vsel %vm680, %v2305, 0
      %v2335 = vsel %vm680, %v2306, 0
      %2337 = vmatprep.subr.bf16.mxu0 %v2335
      %2338 = vmatpush1.bf16.msra.mxu0 %v2332
      %2339 = vmatprep.subr.bf16.mxu0 0
      %2340 = vmatpush1.bf16.msra.mxu0 0
      %2341 = vmatprep.subr.bf16.mxu0 0
      %2342 = vmatpush1.bf16.msra.mxu0 0
      %2343 = vmatprep.subr.bf16.mxu0 0
      %2344 = vmatpush1.bf16.msra.mxu0 0
      %2345 = vmatprep.subr.bf16.mxu0 0
      %2346 = vmatpush1.bf16.msra.mxu0 0
      %2347 = vmatprep.subr.bf16.mxu0 0
      %2348 = vmatpush1.bf16.msra.mxu0 0
      %2349 = vmatprep.subr.bf16.mxu0 0
      %2350 = vmatpush1.bf16.msra.mxu0 0
      %2351 = vmatprep.subr.bf16.mxu0 0
      %2352 = vmatpush1.bf16.msra.mxu0 0
      %2353 = vmatprep.subr.bf16.mxu0 0
      %2354 = vmatpush1.bf16.msra.mxu0 0
      %2355 = vmatprep.subr.bf16.mxu0 0
      %2356 = vmatpush1.bf16.msra.mxu0 0
      %2357 = vmatprep.subr.bf16.mxu0 0
      %2358 = vmatpush1.bf16.msra.mxu0 0
      %2359 = vmatprep.subr.bf16.mxu0 0
      %2360 = vmatpush1.bf16.msra.mxu0 0
      %2361 = vmatprep.subr.bf16.mxu0 0
      %2362 = vmatpush1.bf16.msra.mxu0 0
      %2363 = vmatprep.subr.bf16.mxu0 0
      %2364 = vmatpush1.bf16.msra.mxu0 0
      %2365 = vmatprep.subr.bf16.mxu0 0
      %2366 = vmatpush1.bf16.msra.mxu0 0
      %2367 = vmatprep.subr.bf16.mxu0 0
      %2368 = vmatpush1.bf16.msra.mxu0 0
      %2369 = vmatprep.mubr.bf16.mxu0 0
      %2370 = vmatmul.mubr.bf16.gmra.mrb[0].mxu0 %v2308
      %v2371 = vpop.f32.mrb[0].mxu0
      %v2372 = vadd.f32 0.0, %v2371
      %v2373 = vpop.f32.mrb[0].mxu0
      %v2374 = vadd.f32 0.0, %v2373
      %v2375 = vpop.f32.mrb[0].mxu0
      %v2376 = vadd.f32 0.0, %v2375
      %v2377 = vpop.f32.mrb[0].mxu0
      %v2378 = vadd.f32 0.0, %v2377
      %2379 = vmatprep.mubr.bf16.mxu0 0
      %2380 = vmatmul.mubr.bf16.gmra.mrb[0].mxu0 %v2311
      %v2381 = vpop.f32.mrb[0].mxu0
      %v2382 = vadd.f32 0.0, %v2381
      %v2383 = vpop.f32.mrb[0].mxu0
      %v2384 = vadd.f32 0.0, %v2383
      %v2385 = vpop.f32.mrb[0].mxu0
      %v2386 = vadd.f32 0.0, %v2385
      %v2387 = vpop.f32.mrb[0].mxu0
      %v2388 = vadd.f32 0.0, %v2387
      %2389 = vmatprep.mubr.bf16.mxu0 0
      %2390 = vmatmul.mubr.bf16.gmra.mrb[0].mxu0 %v2314
      %v2391 = vpop.f32.mrb[0].mxu0
      %v2392 = vadd.f32 0.0, %v2391
      %v2393 = vpop.f32.mrb[0].mxu0
      %v2394 = vadd.f32 0.0, %v2393
      %v2395 = vpop.f32.mrb[0].mxu0
      %v2396 = vadd.f32 0.0, %v2395
      %v2397 = vpop.f32.mrb[0].mxu0
      %v2398 = vadd.f32 0.0, %v2397
      %2399 = vmatprep.mubr.bf16.mxu0 0
      %2400 = vmatmul.mubr.bf16.gmra.mrb[0].mxu0 %v2317
      %v2401 = vpop.f32.mrb[0].mxu0
      %v2402 = vadd.f32 0.0, %v2401
      %v2403 = vpop.f32.mrb[0].mxu0
      %v2404 = vadd.f32 0.0, %v2403
      %v2405 = vpop.f32.mrb[0].mxu0
      %v2406 = vadd.f32 0.0, %v2405
      %v2407 = vpop.f32.mrb[0].mxu0
      %v2408 = vadd.f32 0.0, %v2407
      %2409 = vmatprep.mubr.bf16.mxu0 0
      %2410 = vmatmul.mubr.bf16.gmra.mrb[0].mxu0 %v2320
      %v2411 = vpop.f32.mrb[0].mxu0
      %v2412 = vadd.f32 0.0, %v2411
      %v2413 = vpop.f32.mrb[0].mxu0
      %v2414 = vadd.f32 0.0, %v2413
      %v2415 = vpop.f32.mrb[0].mxu0
      %v2416 = vadd.f32 0.0, %v2415
      %v2417 = vpop.f32.mrb[0].mxu0
      %v2418 = vadd.f32 0.0, %v2417
      %2419 = vmatprep.mubr.bf16.mxu0 0
      %2420 = vmatmul.mubr.bf16.gmra.mrb[0].mxu0 %v2323
      %v2421 = vpop.f32.mrb[0].mxu0
      %v2422 = vadd.f32 0.0, %v2421
      %v2423 = vpop.f32.mrb[0].mxu0
      %v2424 = vadd.f32 0.0, %v2423
      %v2425 = vpop.f32.mrb[0].mxu0
      %v2426 = vadd.f32 0.0, %v2425
      %v2427 = vpop.f32.mrb[0].mxu0
      %v2428 = vadd.f32 0.0, %v2427
      %2429 = vmatprep.mubr.bf16.mxu0 0
      %2430 = vmatmul.mubr.bf16.gmra.mrb[0].mxu0 %v2326
      %v2431 = vpop.f32.mrb[0].mxu0
      %v2432 = vadd.f32 0.0, %v2431
      %v2433 = vpop.f32.mrb[0].mxu0
      %v2434 = vadd.f32 0.0, %v2433
      %v2435 = vpop.f32.mrb[0].mxu0
      %v2436 = vadd.f32 0.0, %v2435
      %v2437 = vpop.f32.mrb[0].mxu0
      %v2438 = vadd.f32 0.0, %v2437
      %2439 = vmatprep.mubr.bf16.mxu0 0
      %2440 = vmatmul.mubr.bf16.gmra.mrb[0].mxu0 %v2329
      %v2441 = vpop.f32.mrb[0].mxu0
      %v2442 = vadd.f32 0.0, %v2441
      %v2443 = vpop.f32.mrb[0].mxu0
      %v2444 = vadd.f32 0.0, %v2443
      %v2445 = vpop.f32.mrb[0].mxu0
      %v2446 = vadd.f32 0.0, %v2445
      %v2447 = vpop.f32.mrb[0].mxu0
      %v2448 = vadd.f32 0.0, %v2447
      %2449 = vdwg.mxu0
      %v2450 = vadd.f32 %v2192, %v2372
      %v2451 = vadd.f32 %v2193, %v2374
      %v2452 = vadd.f32 %v2194, %v2376
      %v2453 = vadd.f32 %v2195, %v2378
      %v2454 = vadd.f32 %v2196, %v2382
      %v2455 = vadd.f32 %v2197, %v2384
      %v2456 = vadd.f32 %v2198, %v2386
      %v2457 = vadd.f32 %v2199, %v2388
      %v2458 = vadd.f32 %v2200, %v2392
      %v2459 = vadd.f32 %v2201, %v2394
      %v2460 = vadd.f32 %v2202, %v2396
      %v2461 = vadd.f32 %v2203, %v2398
      %v2462 = vadd.f32 %v2204, %v2402
      %v2463 = vadd.f32 %v2205, %v2404
      %v2464 = vadd.f32 %v2206, %v2406
      %v2465 = vadd.f32 %v2207, %v2408
      %v2466 = vadd.f32 %v2208, %v2412
      %v2467 = vadd.f32 %v2209, %v2414
      %v2468 = vadd.f32 %v2210, %v2416
      %v2469 = vadd.f32 %v2211, %v2418
      %v2470 = vadd.f32 %v2212, %v2422
      %v2471 = vadd.f32 %v2213, %v2424
      %v2472 = vadd.f32 %v2214, %v2426
      %v2473 = vadd.f32 %v2215, %v2428
      %v2474 = vadd.f32 %v2216, %v2432
      %v2475 = vadd.f32 %v2217, %v2434
      %v2476 = vadd.f32 %v2218, %v2436
      %v2477 = vadd.f32 %v2219, %v2438
      %v2478 = vadd.f32 %v2220, %v2442
      %v2479 = vadd.f32 %v2221, %v2444
      %v2480 = vadd.f32 %v2222, %v2446
      %v2481 = vadd.f32 %v2223, %v2448
      %v2482 = vld [vmem:[%s214 + $0x10] sm:$0xf]
      %v2483 = vld [vmem:[%s214 + $0x14] sm:$0xf]
      %v2484 = vld [vmem:[%s214 + $0x18] sm:$0xf]
      %v2485 = vld [vmem:[%s214 + $0x1c] sm:$0xf]
      %v2486 = vld [vmem:[%s214 + $0x20] sm:$0xf]
      %v2487 = vld [vmem:[%s214 + $0x24] sm:$0xf]
      %v2488 = vld [vmem:[%s214 + $0x28] sm:$0xf]
      %v2489 = vld [vmem:[%s214 + $0x2c] sm:$0xf]
      %v2490 = vld [vmem:[%s214 + $0x30] sm:$0xf]
      %v2491 = vld [vmem:[%s214 + $0x34] sm:$0xf]
      %v2492 = vld [vmem:[%s214 + $0x38] sm:$0xf]
      %v2493 = vld [vmem:[%s214 + $0x3c] sm:$0xf]
      %v2494 = vld [vmem:[%s214 + $0x40] sm:$0xf]
      %v2495 = vld [vmem:[%s214 + $0x44] sm:$0xf]
      %v2496 = vld [vmem:[%s214 + $0x48] sm:$0xf]
      %v2497 = vld [vmem:[%s214 + $0x4c] sm:$0xf]
      %v2498 = vld [vmem:[%s214 + $0x50] sm:$0x1]
      %s2499 = scalar_lea.vmem %s219, 28
      %v2500 = vld [vmem:[%s2499] sm:$0xf]
      %v2518 = vunpack.c.l.b16 %v2482
      %v2519 = vunpack.c.l.b16 %v2483
      %v2520 = vunpack.c.l.b16 %v2484
      %v2521 = vunpack.c.l.b16 %v2485
      %v2522 = vunpack.c.l.b16 %v2486
      %v2523 = vunpack.c.l.b16 %v2487
      %v2524 = vunpack.c.l.b16 %v2488
      %v2525 = vunpack.c.l.b16 %v2489
      %v2526 = vunpack.c.l.b16 %v2490
      %v2527 = vunpack.c.l.b16 %v2491
      %v2528 = vunpack.c.l.b16 %v2492
      %v2529 = vunpack.c.l.b16 %v2493
      %v2530 = vunpack.c.l.b16 %v2494
      %v2531 = vunpack.c.l.b16 %v2495
      %v2532 = vunpack.c.l.b16 %v2496
      %v2533 = vunpack.c.l.b16 %v2497
      %v2534 = vunpack.c.l.b16 %v2498
      %v2535 = vpack.c.b16 %v2519, %v2518
      %v2536 = vpack.c.b16 %v2521, %v2520
      %v2537 = vpack.c.b16 %v2523, %v2522
      %v2538 = vpack.c.b16 %v2525, %v2524
      %v2539 = vpack.c.b16 %v2527, %v2526
      %v2540 = vpack.c.b16 %v2529, %v2528
      %v2541 = vpack.c.b16 %v2531, %v2530
      %v2542 = vpack.c.b16 %v2533, %v2532
      %v2543 = vpack.c.b16 %v2534, %v2534
      %v2545 = vshrl.u32 %v2535, 16
      %v2547 = vshll.u32 %v2535, 16
      %v2549 = vrot.slane %v2547, 1
      %v2550 = vor.u32 %v2545, %v2549
      %v2552 = vshll.u32 %v2536, 16
      %v2554 = vrot.slane %v2552, 1
      %v2555 = vsel %vm577, %v2550, %v2554
      %v2556 = vshrl.u32 %v2536, 16
      %v2558 = vor.u32 %v2556, %v2554
      %v2560 = vshll.u32 %v2537, 16
      %v2562 = vrot.slane %v2560, 1
      %v2563 = vsel %vm577, %v2558, %v2562
      %v2564 = vshrl.u32 %v2537, 16
      %v2566 = vor.u32 %v2564, %v2562
      %v2568 = vshll.u32 %v2538, 16
      %v2570 = vrot.slane %v2568, 1
      %v2571 = vsel %vm577, %v2566, %v2570
      %v2572 = vshrl.u32 %v2538, 16
      %v2574 = vor.u32 %v2572, %v2570
      %v2576 = vshll.u32 %v2539, 16
      %v2578 = vrot.slane %v2576, 1
      %v2579 = vsel %vm577, %v2574, %v2578
      %v2580 = vshrl.u32 %v2539, 16
      %v2582 = vor.u32 %v2580, %v2578
      %v2584 = vshll.u32 %v2540, 16
      %v2586 = vrot.slane %v2584, 1
      %v2587 = vsel %vm577, %v2582, %v2586
      %v2588 = vshrl.u32 %v2540, 16
      %v2590 = vor.u32 %v2588, %v2586
      %v2592 = vshll.u32 %v2541, 16
      %v2594 = vrot.slane %v2592, 1
      %v2595 = vsel %vm577, %v2590, %v2594
      %v2596 = vshrl.u32 %v2541, 16
      %v2598 = vor.u32 %v2596, %v2594
      %v2600 = vshll.u32 %v2542, 16
      %v2602 = vrot.slane %v2600, 1
      %v2603 = vsel %vm577, %v2598, %v2602
      %v2604 = vshrl.u32 %v2542, 16
      %v2606 = vor.u32 %v2604, %v2602
      %v2608 = vshll.u32 %v2543, 16
      %v2610 = vrot.slane %v2608, 1
      %v2611 = vsel %vm577, %v2606, %v2610
      %v2614 = vunpack.c.l.s4 1983009808
      %v2615 = vunpack.c.0.s8 %v2614
      %v2616 = vlaneseq
      %v2617 = vshrl.u32 %v2616, 7
      %v2618 = vsub.s32 %v2615, %v2617
      %v2619 = vrot.slane %v2500, %v2618
      %v2620 = vcombine.high %v2619, %v2619
      %v2622 = vsel %vm655, %v2555, 0
      %v2625 = vsel %vm655, %v2563, 0
      %v2628 = vsel %vm655, %v2571, 0
      %v2631 = vsel %vm655, %v2579, 0
      %v2634 = vsel %vm655, %v2587, 0
      %v2637 = vsel %vm655, %v2595, 0
      %v2640 = vsel %vm655, %v2603, 0
      %v2643 = vsel %vm655, %v2611, 0
      %v2646 = vsel %vm680, %v2619, 0
      %v2649 = vsel %vm680, %v2620, 0
      %2651 = vmatprep.subr.bf16.mxu0 %v2649
      %2652 = vmatpush1.bf16.msra.mxu0 %v2646
      %2653 = vmatprep.subr.bf16.mxu0 0
      %2654 = vmatpush1.bf16.msra.mxu0 0
      %2655 = vmatprep.subr.bf16.mxu0 0
      %2656 = vmatpush1.bf16.msra.mxu0 0
      %2657 = vmatprep.subr.bf16.mxu0 0
      %2658 = vmatpush1.bf16.msra.mxu0 0
      %2659 = vmatprep.subr.bf16.mxu0 0
      %2660 = vmatpush1.bf16.msra.mxu0 0
      %2661 = vmatprep.subr.bf16.mxu0 0
      %2662 = vmatpush1.bf16.msra.mxu0 0
      %2663 = vmatprep.subr.bf16.mxu0 0
      %2664 = vmatpush1.bf16.msra.mxu0 0
      %2665 = vmatprep.subr.bf16.mxu0 0
      %2666 = vmatpush1.bf16.msra.mxu0 0
      %2667 = vmatprep.subr.bf16.mxu0 0
      %2668 = vmatpush1.bf16.msra.mxu0 0
      %2669 = vmatprep.subr.bf16.mxu0 0
      %2670 = vmatpush1.bf16.msra.mxu0 0
      %2671 = vmatprep.subr.bf16.mxu0 0
      %2672 = vmatpush1.bf16.msra.mxu0 0
      %2673 = vmatprep.subr.bf16.mxu0 0
      %2674 = vmatpush1.bf16.msra.mxu0 0
      %2675 = vmatprep.subr.bf16.mxu0 0
      %2676 = vmatpush1.bf16.msra.mxu0 0
      %2677 = vmatprep.subr.bf16.mxu0 0
      %2678 = vmatpush1.bf16.msra.mxu0 0
      %2679 = vmatprep.subr.bf16.mxu0 0
      %2680 = vmatpush1.bf16.msra.mxu0 0
      %2681 = vmatprep.subr.bf16.mxu0 0
      %2682 = vmatpush1.bf16.msra.mxu0 0
      %2683 = vmatprep.mubr.bf16.mxu0 0
      %2684 = vmatmul.mubr.bf16.gmra.mrb[0].mxu0 %v2622
      %v2685 = vpop.f32.mrb[0].mxu0
      %v2686 = vadd.f32 0.0, %v2685
      %v2687 = vpop.f32.mrb[0].mxu0
      %v2688 = vadd.f32 0.0, %v2687
      %v2689 = vpop.f32.mrb[0].mxu0
      %v2690 = vadd.f32 0.0, %v2689
      %v2691 = vpop.f32.mrb[0].mxu0
      %v2692 = vadd.f32 0.0, %v2691
      %2693 = vmatprep.mubr.bf16.mxu0 0
      %2694 = vmatmul.mubr.bf16.gmra.mrb[0].mxu0 %v2625
      %v2695 = vpop.f32.mrb[0].mxu0
      %v2696 = vadd.f32 0.0, %v2695
      %v2697 = vpop.f32.mrb[0].mxu0
      %v2698 = vadd.f32 0.0, %v2697
      %v2699 = vpop.f32.mrb[0].mxu0
      %v2700 = vadd.f32 0.0, %v2699
      %v2701 = vpop.f32.mrb[0].mxu0
      %v2702 = vadd.f32 0.0, %v2701
      %2703 = vmatprep.mubr.bf16.mxu0 0
      %2704 = vmatmul.mubr.bf16.gmra.mrb[0].mxu0 %v2628
      %v2705 = vpop.f32.mrb[0].mxu0
      %v2706 = vadd.f32 0.0, %v2705
      %v2707 = vpop.f32.mrb[0].mxu0
      %v2708 = vadd.f32 0.0, %v2707
      %v2709 = vpop.f32.mrb[0].mxu0
      %v2710 = vadd.f32 0.0, %v2709
      %v2711 = vpop.f32.mrb[0].mxu0
      %v2712 = vadd.f32 0.0, %v2711
      %2713 = vmatprep.mubr.bf16.mxu0 0
      %2714 = vmatmul.mubr.bf16.gmra.mrb[0].mxu0 %v2631
      %v2715 = vpop.f32.mrb[0].mxu0
      %v2716 = vadd.f32 0.0, %v2715
      %v2717 = vpop.f32.mrb[0].mxu0
      %v2718 = vadd.f32 0.0, %v2717
      %v2719 = vpop.f32.mrb[0].mxu0
      %v2720 = vadd.f32 0.0, %v2719
      %v2721 = vpop.f32.mrb[0].mxu0
      %v2722 = vadd.f32 0.0, %v2721
      %2723 = vmatprep.mubr.bf16.mxu0 0
      %2724 = vmatmul.mubr.bf16.gmra.mrb[0].mxu0 %v2634
      %v2725 = vpop.f32.mrb[0].mxu0
      %v2726 = vadd.f32 0.0, %v2725
      %v2727 = vpop.f32.mrb[0].mxu0
      %v2728 = vadd.f32 0.0, %v2727
      %v2729 = vpop.f32.mrb[0].mxu0
      %v2730 = vadd.f32 0.0, %v2729
      %v2731 = vpop.f32.mrb[0].mxu0
      %v2732 = vadd.f32 0.0, %v2731
      %2733 = vmatprep.mubr.bf16.mxu0 0
      %2734 = vmatmul.mubr.bf16.gmra.mrb[0].mxu0 %v2637
      %v2735 = vpop.f32.mrb[0].mxu0
      %v2736 = vadd.f32 0.0, %v2735
      %v2737 = vpop.f32.mrb[0].mxu0
      %v2738 = vadd.f32 0.0, %v2737
      %v2739 = vpop.f32.mrb[0].mxu0
      %v2740 = vadd.f32 0.0, %v2739
      %v2741 = vpop.f32.mrb[0].mxu0
      %v2742 = vadd.f32 0.0, %v2741
      %2743 = vmatprep.mubr.bf16.mxu0 0
      %2744 = vmatmul.mubr.bf16.gmra.mrb[0].mxu0 %v2640
      %v2745 = vpop.f32.mrb[0].mxu0
      %v2746 = vadd.f32 0.0, %v2745
      %v2747 = vpop.f32.mrb[0].mxu0
      %v2748 = vadd.f32 0.0, %v2747
      %v2749 = vpop.f32.mrb[0].mxu0
      %v2750 = vadd.f32 0.0, %v2749
      %v2751 = vpop.f32.mrb[0].mxu0
      %v2752 = vadd.f32 0.0, %v2751
      %2753 = vmatprep.mubr.bf16.mxu0 0
      %2754 = vmatmul.mubr.bf16.gmra.mrb[0].mxu0 %v2643
      %v2755 = vpop.f32.mrb[0].mxu0
      %v2756 = vadd.f32 0.0, %v2755
      %v2757 = vpop.f32.mrb[0].mxu0
      %v2758 = vadd.f32 0.0, %v2757
      %v2759 = vpop.f32.mrb[0].mxu0
      %v2760 = vadd.f32 0.0, %v2759
      %v2761 = vpop.f32.mrb[0].mxu0
      %v2762 = vadd.f32 0.0, %v2761
      %2763 = vdwg.mxu0
      %v2764 = vadd.f32 %v2450, %v2686
      %v2765 = vadd.f32 %v2451, %v2688
      %v2766 = vadd.f32 %v2452, %v2690
      %v2767 = vadd.f32 %v2453, %v2692
      %v2768 = vadd.f32 %v2454, %v2696
      %v2769 = vadd.f32 %v2455, %v2698
      %v2770 = vadd.f32 %v2456, %v2700
      %v2771 = vadd.f32 %v2457, %v2702
      %v2772 = vadd.f32 %v2458, %v2706
      %v2773 = vadd.f32 %v2459, %v2708
      %v2774 = vadd.f32 %v2460, %v2710
      %v2775 = vadd.f32 %v2461, %v2712
      %v2776 = vadd.f32 %v2462, %v2716
      %v2777 = vadd.f32 %v2463, %v2718
      %v2778 = vadd.f32 %v2464, %v2720
      %v2779 = vadd.f32 %v2465, %v2722
      %v2780 = vadd.f32 %v2466, %v2726
      %v2781 = vadd.f32 %v2467, %v2728
      %v2782 = vadd.f32 %v2468, %v2730
      %v2783 = vadd.f32 %v2469, %v2732
      %v2784 = vadd.f32 %v2470, %v2736
      %v2785 = vadd.f32 %v2471, %v2738
      %v2786 = vadd.f32 %v2472, %v2740
      %v2787 = vadd.f32 %v2473, %v2742
      %v2788 = vadd.f32 %v2474, %v2746
      %v2789 = vadd.f32 %v2475, %v2748
      %v2790 = vadd.f32 %v2476, %v2750
      %v2791 = vadd.f32 %v2477, %v2752
      %v2792 = vadd.f32 %v2478, %v2756
      %v2793 = vadd.f32 %v2479, %v2758
      %v2794 = vadd.f32 %v2480, %v2760
      %v2795 = vadd.f32 %v2481, %v2762
      %v2796 = vld [vmem:[%s214 + $0x10] sm:$0xe]
      %v2797 = vld [vmem:[%s214 + $0x14] sm:$0xf]
      %v2798 = vld [vmem:[%s214 + $0x18] sm:$0xf]
      %v2799 = vld [vmem:[%s214 + $0x1c] sm:$0xf]
      %v2800 = vld [vmem:[%s214 + $0x20] sm:$0xf]
      %v2801 = vld [vmem:[%s214 + $0x24] sm:$0xf]
      %v2802 = vld [vmem:[%s214 + $0x28] sm:$0xf]
      %v2803 = vld [vmem:[%s214 + $0x2c] sm:$0xf]
      %v2804 = vld [vmem:[%s214 + $0x30] sm:$0xf]
      %v2805 = vld [vmem:[%s214 + $0x34] sm:$0xf]
      %v2806 = vld [vmem:[%s214 + $0x38] sm:$0xf]
      %v2807 = vld [vmem:[%s214 + $0x3c] sm:$0xf]
      %v2808 = vld [vmem:[%s214 + $0x40] sm:$0xf]
      %v2809 = vld [vmem:[%s214 + $0x44] sm:$0xf]
      %v2810 = vld [vmem:[%s214 + $0x48] sm:$0xf]
      %v2811 = vld [vmem:[%s214 + $0x4c] sm:$0xf]
      %v2812 = vld [vmem:[%s214 + $0x50] sm:$0x1]
      %v2813 = vsel %vm1091, %v2796, 0
      %v2814 = vsel %vm1092, %v2797, 0
      %v2815 = vsel %vm1093, %v2798, 0
      %v2816 = vsel %vm1094, %v2799, 0
      %v2817 = vsel %vm1095, %v2800, 0
      %v2818 = vsel %vm1096, %v2801, 0
      %v2819 = vsel %vm1097, %v2802, 0
      %v2820 = vsel %vm1098, %v2803, 0
      %v2821 = vsel %vm1099, %v2804, 0
      %v2822 = vsel %vm1100, %v2805, 0
      %v2823 = vsel %vm1101, %v2806, 0
      %v2824 = vsel %vm1102, %v2807, 0
      %v2825 = vsel %vm1103, %v2808, 0
      %v2826 = vsel %vm1104, %v2809, 0
      %v2827 = vsel %vm1105, %v2810, 0
      %v2828 = vsel %vm1106, %v2811, 0
      %v2829 = vsel %vm1107, %v2812, 0
      %s2830 = scalar_lea.vmem %s219, 32
      %v2831 = vld [vmem:[%s2830] sm:$0xf]
      %v2849 = vunpack.c.l.b16 %v2813
      %v2850 = vunpack.c.l.b16 %v2814
      %v2851 = vunpack.c.l.b16 %v2815
      %v2852 = vunpack.c.l.b16 %v2816
      %v2853 = vunpack.c.l.b16 %v2817
      %v2854 = vunpack.c.l.b16 %v2818
      %v2855 = vunpack.c.l.b16 %v2819
      %v2856 = vunpack.c.l.b16 %v2820
      %v2857 = vunpack.c.l.b16 %v2821
      %v2858 = vunpack.c.l.b16 %v2822
      %v2859 = vunpack.c.l.b16 %v2823
      %v2860 = vunpack.c.l.b16 %v2824
      %v2861 = vunpack.c.l.b16 %v2825
      %v2862 = vunpack.c.l.b16 %v2826
      %v2863 = vunpack.c.l.b16 %v2827
      %v2864 = vunpack.c.l.b16 %v2828
      %v2865 = vunpack.c.l.b16 %v2829
      %v2866 = vpack.c.b16 %v2850, %v2849
      %v2867 = vpack.c.b16 %v2852, %v2851
      %v2868 = vpack.c.b16 %v2854, %v2853
      %v2869 = vpack.c.b16 %v2856, %v2855
      %v2870 = vpack.c.b16 %v2858, %v2857
      %v2871 = vpack.c.b16 %v2860, %v2859
      %v2872 = vpack.c.b16 %v2862, %v2861
      %v2873 = vpack.c.b16 %v2864, %v2863
      %v2874 = vpack.c.b16 %v2865, %v2865
      %v2875 = vrot.slane %v2866, 1
      %v2876 = vrot.slane %v2867, 1
      %v2877 = vsel %vm1170, %v2875, %v2876
      %v2878 = vrot.slane %v2868, 1
      %v2879 = vsel %vm1170, %v2876, %v2878
      %v2880 = vrot.slane %v2869, 1
      %v2881 = vsel %vm1170, %v2878, %v2880
      %v2882 = vrot.slane %v2870, 1
      %v2883 = vsel %vm1170, %v2880, %v2882
      %v2884 = vrot.slane %v2871, 1
      %v2885 = vsel %vm1170, %v2882, %v2884
      %v2886 = vrot.slane %v2872, 1
      %v2887 = vsel %vm1170, %v2884, %v2886
      %v2888 = vrot.slane %v2873, 1
      %v2889 = vsel %vm1170, %v2886, %v2888
      %v2890 = vrot.slane %v2874, 1
      %v2891 = vsel %vm1170, %v2888, %v2890
      %v2894 = vunpack.c.l.s4 1983009808
      %v2895 = vunpack.c.0.s8 %v2894
      %v2896 = vlaneseq
      %v2897 = vshrl.u32 %v2896, 7
      %v2898 = vsub.s32 %v2895, %v2897
      %v2899 = vrot.slane %v2831, %v2898
      %v2900 = vcombine.high %v2899, %v2899
      %v2902 = vsel %vm655, %v2877, 0
      %v2905 = vsel %vm655, %v2879, 0
      %v2908 = vsel %vm655, %v2881, 0
      %v2911 = vsel %vm655, %v2883, 0
      %v2914 = vsel %vm655, %v2885, 0
      %v2917 = vsel %vm655, %v2887, 0
      %v2920 = vsel %vm655, %v2889, 0
      %v2923 = vsel %vm655, %v2891, 0
      %v2926 = vsel %vm680, %v2899, 0
      %v2929 = vsel %vm680, %v2900, 0
      %2931 = vmatprep.subr.bf16.mxu0 %v2929
      %2932 = vmatpush1.bf16.msra.mxu0 %v2926
      %2933 = vmatprep.subr.bf16.mxu0 0
      %2934 = vmatpush1.bf16.msra.mxu0 0
      %2935 = vmatprep.subr.bf16.mxu0 0
      %2936 = vmatpush1.bf16.msra.mxu0 0
      %2937 = vmatprep.subr.bf16.mxu0 0
      %2938 = vmatpush1.bf16.msra.mxu0 0
      %2939 = vmatprep.subr.bf16.mxu0 0
      %2940 = vmatpush1.bf16.msra.mxu0 0
      %2941 = vmatprep.subr.bf16.mxu0 0
      %2942 = vmatpush1.bf16.msra.mxu0 0
      %2943 = vmatprep.subr.bf16.mxu0 0
      %2944 = vmatpush1.bf16.msra.mxu0 0
      %2945 = vmatprep.subr.bf16.mxu0 0
      %2946 = vmatpush1.bf16.msra.mxu0 0
      %2947 = vmatprep.subr.bf16.mxu0 0
      %2948 = vmatpush1.bf16.msra.mxu0 0
      %2949 = vmatprep.subr.bf16.mxu0 0
      %2950 = vmatpush1.bf16.msra.mxu0 0
      %2951 = vmatprep.subr.bf16.mxu0 0
      %2952 = vmatpush1.bf16.msra.mxu0 0
      %2953 = vmatprep.subr.bf16.mxu0 0
      %2954 = vmatpush1.bf16.msra.mxu0 0
      %2955 = vmatprep.subr.bf16.mxu0 0
      %2956 = vmatpush1.bf16.msra.mxu0 0
      %2957 = vmatprep.subr.bf16.mxu0 0
      %2958 = vmatpush1.bf16.msra.mxu0 0
      %2959 = vmatprep.subr.bf16.mxu0 0
      %2960 = vmatpush1.bf16.msra.mxu0 0
      %2961 = vmatprep.subr.bf16.mxu0 0
      %2962 = vmatpush1.bf16.msra.mxu0 0
      %2963 = vmatprep.mubr.bf16.mxu0 0
      %2964 = vmatmul.mubr.bf16.gmra.mrb[0].mxu0 %v2902
      %v2965 = vpop.f32.mrb[0].mxu0
      %v2966 = vadd.f32 0.0, %v2965
      %v2967 = vpop.f32.mrb[0].mxu0
      %v2968 = vadd.f32 0.0, %v2967
      %v2969 = vpop.f32.mrb[0].mxu0
      %v2970 = vadd.f32 0.0, %v2969
      %v2971 = vpop.f32.mrb[0].mxu0
      %v2972 = vadd.f32 0.0, %v2971
      %2973 = vmatprep.mubr.bf16.mxu0 0
      %2974 = vmatmul.mubr.bf16.gmra.mrb[0].mxu0 %v2905
      %v2975 = vpop.f32.mrb[0].mxu0
      %v2976 = vadd.f32 0.0, %v2975
      %v2977 = vpop.f32.mrb[0].mxu0
      %v2978 = vadd.f32 0.0, %v2977
      %v2979 = vpop.f32.mrb[0].mxu0
      %v2980 = vadd.f32 0.0, %v2979
      %v2981 = vpop.f32.mrb[0].mxu0
      %v2982 = vadd.f32 0.0, %v2981
      %2983 = vmatprep.mubr.bf16.mxu0 0
      %2984 = vmatmul.mubr.bf16.gmra.mrb[0].mxu0 %v2908
      %v2985 = vpop.f32.mrb[0].mxu0
      %v2986 = vadd.f32 0.0, %v2985
      %v2987 = vpop.f32.mrb[0].mxu0
      %v2988 = vadd.f32 0.0, %v2987
      %v2989 = vpop.f32.mrb[0].mxu0
      %v2990 = vadd.f32 0.0, %v2989
      %v2991 = vpop.f32.mrb[0].mxu0
      %v2992 = vadd.f32 0.0, %v2991
      %2993 = vmatprep.mubr.bf16.mxu0 0
      %2994 = vmatmul.mubr.bf16.gmra.mrb[0].mxu0 %v2911
      %v2995 = vpop.f32.mrb[0].mxu0
      %v2996 = vadd.f32 0.0, %v2995
      %v2997 = vpop.f32.mrb[0].mxu0
      %v2998 = vadd.f32 0.0, %v2997
      %v2999 = vpop.f32.mrb[0].mxu0
      %v3000 = vadd.f32 0.0, %v2999
      %v3001 = vpop.f32.mrb[0].mxu0
      %v3002 = vadd.f32 0.0, %v3001
      %3003 = vmatprep.mubr.bf16.mxu0 0
      %3004 = vmatmul.mubr.bf16.gmra.mrb[0].mxu0 %v2914
      %v3005 = vpop.f32.mrb[0].mxu0
      %v3006 = vadd.f32 0.0, %v3005
      %v3007 = vpop.f32.mrb[0].mxu0
      %v3008 = vadd.f32 0.0, %v3007
      %v3009 = vpop.f32.mrb[0].mxu0
      %v3010 = vadd.f32 0.0, %v3009
      %v3011 = vpop.f32.mrb[0].mxu0
      %v3012 = vadd.f32 0.0, %v3011
      %3013 = vmatprep.mubr.bf16.mxu0 0
      %3014 = vmatmul.mubr.bf16.gmra.mrb[0].mxu0 %v2917
      %v3015 = vpop.f32.mrb[0].mxu0
      %v3016 = vadd.f32 0.0, %v3015
      %v3017 = vpop.f32.mrb[0].mxu0
      %v3018 = vadd.f32 0.0, %v3017
      %v3019 = vpop.f32.mrb[0].mxu0
      %v3020 = vadd.f32 0.0, %v3019
      %v3021 = vpop.f32.mrb[0].mxu0
      %v3022 = vadd.f32 0.0, %v3021
      %3023 = vmatprep.mubr.bf16.mxu0 0
      %3024 = vmatmul.mubr.bf16.gmra.mrb[0].mxu0 %v2920
      %v3025 = vpop.f32.mrb[0].mxu0
      %v3026 = vadd.f32 0.0, %v3025
      %v3027 = vpop.f32.mrb[0].mxu0
      %v3028 = vadd.f32 0.0, %v3027
      %v3029 = vpop.f32.mrb[0].mxu0
      %v3030 = vadd.f32 0.0, %v3029
      %v3031 = vpop.f32.mrb[0].mxu0
      %v3032 = vadd.f32 0.0, %v3031
      %3033 = vmatprep.mubr.bf16.mxu0 0
      %3034 = vmatmul.mubr.bf16.gmra.mrb[0].mxu0 %v2923
      %v3035 = vpop.f32.mrb[0].mxu0
      %v3036 = vadd.f32 0.0, %v3035
      %v3037 = vpop.f32.mrb[0].mxu0
      %v3038 = vadd.f32 0.0, %v3037
      %v3039 = vpop.f32.mrb[0].mxu0
      %v3040 = vadd.f32 0.0, %v3039
      %v3041 = vpop.f32.mrb[0].mxu0
      %v3042 = vadd.f32 0.0, %v3041
      %3043 = vdwg.mxu0
      %v3044 = vadd.f32 %v2764, %v2966
      %v3045 = vadd.f32 %v2765, %v2968
      %v3046 = vadd.f32 %v2766, %v2970
      %v3047 = vadd.f32 %v2767, %v2972
      %v3048 = vadd.f32 %v2768, %v2976
      %v3049 = vadd.f32 %v2769, %v2978
      %v3050 = vadd.f32 %v2770, %v2980
      %v3051 = vadd.f32 %v2771, %v2982
      %v3052 = vadd.f32 %v2772, %v2986
      %v3053 = vadd.f32 %v2773, %v2988
      %v3054 = vadd.f32 %v2774, %v2990
      %v3055 = vadd.f32 %v2775, %v2992
      %v3056 = vadd.f32 %v2776, %v2996
      %v3057 = vadd.f32 %v2777, %v2998
      %v3058 = vadd.f32 %v2778, %v3000
      %v3059 = vadd.f32 %v2779, %v3002
      %v3060 = vadd.f32 %v2780, %v3006
      %v3061 = vadd.f32 %v2781, %v3008
      %v3062 = vadd.f32 %v2782, %v3010
      %v3063 = vadd.f32 %v2783, %v3012
      %v3064 = vadd.f32 %v2784, %v3016
      %v3065 = vadd.f32 %v2785, %v3018
      %v3066 = vadd.f32 %v2786, %v3020
      %v3067 = vadd.f32 %v2787, %v3022
      %v3068 = vadd.f32 %v2788, %v3026
      %v3069 = vadd.f32 %v2789, %v3028
      %v3070 = vadd.f32 %v2790, %v3030
      %v3071 = vadd.f32 %v2791, %v3032
      %v3072 = vadd.f32 %v2792, %v3036
      %v3073 = vadd.f32 %v2793, %v3038
      %v3074 = vadd.f32 %v2794, %v3040
      %v3075 = vadd.f32 %v2795, %v3042
      %v3076 = vld [vmem:[%s224] sm:$0x3]
      %v3078 = vlaneseq
      %v3079 = vshrl.u32 %v3078, 7
      %v3080 = vsub.s32 0, %v3079
      %v3081 = vrot.slane %v3076, %v3080
      %v3082 = vlaneseq
      %v3083 = vshrl.u32 %v3082, 7
      %v3084 = vsub.s32 1, %v3083
      %v3085 = vrot.slane %v3076, %v3084
      %v3088 = vadd.f32 %v3044, %v3081
      %v3089 = vadd.f32 %v3045, %v3085
      %v3090 = vadd.f32 %v3046, %v3081
      %v3091 = vadd.f32 %v3047, %v3085
      %v3092 = vadd.f32 %v3048, %v3081
      %v3093 = vadd.f32 %v3049, %v3085
      %v3094 = vadd.f32 %v3050, %v3081
      %v3095 = vadd.f32 %v3051, %v3085
      %v3096 = vadd.f32 %v3052, %v3081
      %v3097 = vadd.f32 %v3053, %v3085
      %v3098 = vadd.f32 %v3054, %v3081
      %v3099 = vadd.f32 %v3055, %v3085
      %v3100 = vadd.f32 %v3056, %v3081
      %v3101 = vadd.f32 %v3057, %v3085
      %v3102 = vadd.f32 %v3058, %v3081
      %v3103 = vadd.f32 %v3059, %v3085
      %v3104 = vadd.f32 %v3060, %v3081
      %v3105 = vadd.f32 %v3061, %v3085
      %v3106 = vadd.f32 %v3062, %v3081
      %v3107 = vadd.f32 %v3063, %v3085
      %v3108 = vadd.f32 %v3064, %v3081
      %v3109 = vadd.f32 %v3065, %v3085
      %v3110 = vadd.f32 %v3066, %v3081
      %v3111 = vadd.f32 %v3067, %v3085
      %v3112 = vadd.f32 %v3068, %v3081
      %v3113 = vadd.f32 %v3069, %v3085
      %v3114 = vadd.f32 %v3070, %v3081
      %v3115 = vadd.f32 %v3071, %v3085
      %v3116 = vadd.f32 %v3072, %v3081
      %v3117 = vadd.f32 %v3073, %v3085
      %v3118 = vadd.f32 %v3074, %v3081
      %v3119 = vadd.f32 %v3075, %v3085
      %v3120 = vmax.f32 %v3088, 0.0
      %v3121 = vmax.f32 %v3089, 0.0
      %v3122 = vmax.f32 %v3090, 0.0
      %v3123 = vmax.f32 %v3091, 0.0
      %v3124 = vmax.f32 %v3092, 0.0
      %v3125 = vmax.f32 %v3093, 0.0
      %v3126 = vmax.f32 %v3094, 0.0
      %v3127 = vmax.f32 %v3095, 0.0
      %v3128 = vmax.f32 %v3096, 0.0
      %v3129 = vmax.f32 %v3097, 0.0
      %v3130 = vmax.f32 %v3098, 0.0
      %v3131 = vmax.f32 %v3099, 0.0
      %v3132 = vmax.f32 %v3100, 0.0
      %v3133 = vmax.f32 %v3101, 0.0
      %v3134 = vmax.f32 %v3102, 0.0
      %v3135 = vmax.f32 %v3103, 0.0
      %v3136 = vmax.f32 %v3104, 0.0
      %v3137 = vmax.f32 %v3105, 0.0
      %v3138 = vmax.f32 %v3106, 0.0
      %v3139 = vmax.f32 %v3107, 0.0
      %v3140 = vmax.f32 %v3108, 0.0
      %v3141 = vmax.f32 %v3109, 0.0
      %v3142 = vmax.f32 %v3110, 0.0
      %v3143 = vmax.f32 %v3111, 0.0
      %v3144 = vmax.f32 %v3112, 0.0
      %v3145 = vmax.f32 %v3113, 0.0
      %v3146 = vmax.f32 %v3114, 0.0
      %v3147 = vmax.f32 %v3115, 0.0
      %v3148 = vmax.f32 %v3116, 0.0
      %v3149 = vmax.f32 %v3117, 0.0
      %v3150 = vmax.f32 %v3118, 0.0
      %v3151 = vmax.f32 %v3119, 0.0
      %3152 = vst [vmem:[%s235] sm:$0xff] %v3120
      %3153 = vst [vmem:[%s235 + $0x8] sm:$0xff] %v3121
      %3154 = vst [vmem:[%s235 + $0x10] sm:$0xff] %v3122
      %3155 = vst [vmem:[%s235 + $0x18] sm:$0xff] %v3123
      %3156 = vst [vmem:[%s235 + $0x20] sm:$0xff] %v3124
      %3157 = vst [vmem:[%s235 + $0x28] sm:$0xff] %v3125
      %3158 = vst [vmem:[%s235 + $0x30] sm:$0xff] %v3126
      %3159 = vst [vmem:[%s235 + $0x38] sm:$0xff] %v3127
      %3160 = vst [vmem:[%s235 + $0x40] sm:$0xff] %v3128
      %3161 = vst [vmem:[%s235 + $0x48] sm:$0xff] %v3129
      %3162 = vst [vmem:[%s235 + $0x50] sm:$0xff] %v3130
      %3163 = vst [vmem:[%s235 + $0x58] sm:$0xff] %v3131
      %3164 = vst [vmem:[%s235 + $0x60] sm:$0xff] %v3132
      %3165 = vst [vmem:[%s235 + $0x68] sm:$0xff] %v3133
      %3166 = vst [vmem:[%s235 + $0x70] sm:$0xff] %v3134
      %3167 = vst [vmem:[%s235 + $0x78] sm:$0xff] %v3135
      %3168 = vst [vmem:[%s235 + $0x80] sm:$0xff] %v3136
      %3169 = vst [vmem:[%s235 + $0x88] sm:$0xff] %v3137
      %3170 = vst [vmem:[%s235 + $0x90] sm:$0xff] %v3138
      %3171 = vst [vmem:[%s235 + $0x98] sm:$0xff] %v3139
      %3172 = vst [vmem:[%s235 + $0xa0] sm:$0xff] %v3140
      %3173 = vst [vmem:[%s235 + $0xa8] sm:$0xff] %v3141
      %3174 = vst [vmem:[%s235 + $0xb0] sm:$0xff] %v3142
      %3175 = vst [vmem:[%s235 + $0xb8] sm:$0xff] %v3143
      %3176 = vst [vmem:[%s235 + $0xc0] sm:$0xff] %v3144
      %3177 = vst [vmem:[%s235 + $0xc8] sm:$0xff] %v3145
      %3178 = vst [vmem:[%s235 + $0xd0] sm:$0xff] %v3146
      %3179 = vst [vmem:[%s235 + $0xd8] sm:$0xff] %v3147
      %3180 = vst [vmem:[%s235 + $0xe0] sm:$0xff] %v3148
      %3181 = vst [vmem:[%s235 + $0xe8] sm:$0xff] %v3149
      %3182 = vst [vmem:[%s235 + $0xf0] sm:$0xff] %v3150
      %3183 = vst [vmem:[%s235 + $0xf8] sm:$0xff] %v3151
      %s3184 = smul.u32 16, %s19
      %s3185 = smul.u32 2, %s18
      %p3186 = scmp.lt.s32.totalorder %s3184, 63
      %s3187 = scalar_select %p3186, %s3184, 63
      %p3188 = scmp.lt.s32.totalorder %s3185, 1
      %s3189 = scalar_select %p3188, %s3185, 1
      %s3190 = smul.addr %s3187, 2
      %s3191 = sadd.s32 %s3189, %s3190
      %s3192 = smul.addr %s3191, 8
      %s3193 = scalar_lea.vmem %s3, %s3192
      // Predicated region
      $region33: #{cnn_transposed_layer_forward.1} parent=31 // pred_check
        %p3194 = pneg %p124
      $region34: #{cnn_transposed_layer_forward.1} parent=31 // pred_check_branch
        %3196 = sbr.rel (%p3194) target = $region36
      $region35: #{cnn_transposed_layer_forward.1} parent=31 // pred_region
        %s3197 = smul.u32 16, %s19
        %s3198 = smul.u32 2, %s18
      $region36: #{cnn_transposed_layer_forward.1} parent=31 // pred_fallthru
        _
    $region32: #{cnn_transposed_layer_forward.1} parent=5 // pred_fallthru
      _
    %p3199 = scmp.le.s32.totalorder 2, %s9
    // Predicated region
    $region37: #{cnn_transposed_layer_forward.1} parent=5 // pred_check
      %p3200 = pneg %p3199
    $region38: #{cnn_transposed_layer_forward.1} parent=5 // pred_check_branch
      %3202 = sbr.rel (%p3200) target = $region40
    $region39: #{cnn_transposed_layer_forward.1} parent=5 // pred_region
      %s3203 = ssub.s32 %s9, 2
      // Predicated region
      $region41: #{cnn_transposed_layer_forward.1} parent=39 // pred_check
        %p3204 = pneg %p130
      $region42: #{cnn_transposed_layer_forward.1} parent=39 // pred_check_branch
        %3206 = sbr.rel (%p3204) target = $region44
      $region43: #{cnn_transposed_layer_forward.1} parent=39 // pred_region
        %s3207 = smul.u32 16, %s21
        %s3208 = smul.u32 2, %s20
        %p3209 = scmp.lt.s32.totalorder %s3207, 63
        %s3210 = scalar_select %p3209, %s3207, 63
        %p3211 = scmp.lt.s32.totalorder %s3208, 1
        %s3212 = scalar_select %p3211, %s3208, 1
        %s3213 = smul.addr %s3210, 2
        %s3214 = sadd.s32 %s3212, %s3213
        %s3215 = smul.addr %s3214, 8
        %s3216 = scalar_lea.vmem %s3, %s3215
      $region44: #{cnn_transposed_layer_forward.1} parent=39 // pred_fallthru
        _
    $region40: #{cnn_transposed_layer_forward.1} parent=5 // pred_fallthru
      _
  $region6: #{cnn_transposed_layer_forward.1} parent=0 // loop_footer
    %s13 = sadd.s32 1, %s9
  $region7: #{cnn_transposed_layer_forward.1} parent=0 // loop_footer_branch
    %8 = sbr.rel target = $region3
  $region8: #{cnn_transposed_layer_forward.1} parent=0 // loop_exit
    _

</llo_original>
